<compile_context>
chip_gen: v6e
topology: v6e:2x2x1
jax: 0.10.0
libtpu: 0.0.40
codegen_flags: <defaults>
</compile_context>

<pallas_src>
import functools
import math

import jax
import jax.numpy as jnp
from jax.experimental import pallas as pl
from jax.experimental.pallas import tpu as pltpu


def _layer_norm(x, gamma, beta, eps):
    mu = jnp.mean(x, axis=-1, keepdims=True)
    var = jnp.mean((x - mu) ** 2, axis=-1, keepdims=True)
    return (x - mu) * jax.lax.rsqrt(var + eps) * gamma + beta


def _gelu_exact(x):
    # matches torch.nn.functional.gelu (erf form)
    return 0.5 * x * (1.0 + jax.lax.erf(x * (1.0 / math.sqrt(2.0))))


def _bf16(x):
    return x.astype(jnp.bfloat16)


def encoder_kernel(bias_ref, x_ref,
                   wqkv_ref, bqkv_ref, wo_ref, bo_ref,
                   w1_ref, b1_ref, w2_ref, b2_ref,
                   g1_ref, be1_ref, g2_ref, be2_ref,
                   out_ref, xres_ref, *, nhead, eps):
    l = pl.program_id(1)

    # ---- layer 0: bring the sequence into the resident VMEM scratch ----
    @pl.when(l == 0)
    def _():
        xres_ref[...] = x_ref[0]

    x = xres_ref[...]                                  # (S, D) f32 residual stream
    S, D = x.shape
    hd = D // nhead
    # key-padding bias broadcast hoisted out of the head loop
    bias_full = jnp.broadcast_to(bias_ref[0], (S, S))  # (S, S) f32

    # ---------------- self-attention block (norm_first=True) ----------------
    h = _layer_norm(x, g1_ref[0], be1_ref[0], eps)     # f32 elementwise
    # qkv projection on the MXU in bf16 (weights pre-cast on host),
    # f32 accumulation. 1/sqrt(hd) is folded into the q columns of wqkv/bqkv.
    qkv = jnp.dot(_bf16(h), wqkv_ref[0],
                  preferred_element_type=jnp.float32) + bqkv_ref[0]   # (S, 3D) f32

    ctx_heads = []
    for hi in range(nhead):                            # static head loop, 2-D slices only
        q = qkv[:, hi * hd:(hi + 1) * hd]              # (S, hd)
        k = qkv[:, D + hi * hd:D + (hi + 1) * hd]      # (S, hd)
        v = qkv[:, 2 * D + hi * hd:2 * D + (hi + 1) * hd]
        s = jnp.einsum('qd,kd->qk', _bf16(q), _bf16(k),
                       preferred_element_type=jnp.float32)            # (S, S) f32
        s = s + bias_full
        m = jnp.max(s, axis=-1, keepdims=True)
        e = jnp.exp(s - m)                             # f32 softmax math
        denom = jnp.sum(e, axis=-1, keepdims=True)
        p = e * pl.reciprocal(denom, approx=True)      # divide on the EUP slot
        ctx_heads.append(jnp.dot(_bf16(p), _bf16(v),
                                 preferred_element_type=jnp.float32))  # (S, hd)
    ctx = jnp.concatenate(ctx_heads, axis=-1)          # (S, D)

    attn = jnp.dot(_bf16(ctx), wo_ref[0],
                   preferred_element_type=jnp.float32) + bo_ref[0]
    x = x + attn

    # ---------------- feed-forward block (norm_first=True) ----------------
    h2 = _layer_norm(x, g2_ref[0], be2_ref[0], eps)
    f = jnp.dot(_bf16(h2), w1_ref[0],
                preferred_element_type=jnp.float32) + b1_ref[0]
    f = _gelu_exact(f)                                 # f32 erf-GELU
    f = jnp.dot(_bf16(f), w2_ref[0],
                preferred_element_type=jnp.float32) + b2_ref[0]
    x = x + f

    xres_ref[...] = x                                  # carry residual to next layer

    # ---- last layer: flush the resident activation to the output block ----
    @pl.when(l == pl.num_programs(1) - 1)
    def _():
        out_ref[0] = x.astype(out_ref.dtype)


def _vmem_limit_bytes(S, D, dff):
    # per-layer weights (bf16) + biases/LN (f32) + per-batch activations,
    # double-buffered, + scratch + in-kernel temporaries + slack
    wbytes = 2 * (D * 3 * D + D * D + D * dff + dff * D)        # bf16 matmul weights
    wbytes += 4 * (3 * D + D + dff + D + 4 * D)                 # f32 biases + LN params
    abytes = 4 * (2 * S * D + S)                                # x, out, bias
    tmp = 4 * (S * 3 * D + S * dff + 2 * S * D)                 # qkv, ffn hidden, ctx/attn
    need = 2 * (wbytes + abytes) + 4 * S * D + tmp + (2 << 20)
    return int(min(max(need, 16 * 1024 * 1024), 64 * 1024 * 1024))


def vanilla_transformer_encoder(x, mask, params, *, nhead, eps=1e-5):
    """x: (B, S, D) float32; mask: (B, S), nonzero = valid token (PyTorch module
    uses src_key_padding_mask = (mask == 0)), or None."""
    B, S, D = x.shape
    L = len(params)
    dff = params[0]['w1'].shape[1]
    hd = D // nhead

    # ----- stack per-layer weights along a leading L axis -----
    def stack(name):
        return jnp.stack([p[name] for p in params], axis=0)

    wqkv = stack('wqkv')        # (L, D, 3D)
    bqkv = stack('bqkv')        # (L, 1, 3D)
    # fold the 1/sqrt(hd) attention scale into the q columns (host-side, f32)
    q_scale = jnp.concatenate([jnp.full((D,), 1.0 / math.sqrt(hd), jnp.float32),
                               jnp.ones((2 * D,), jnp.float32)], axis=0)
    wqkv = wqkv * q_scale
    bqkv = bqkv * q_scale
    wo, bo = stack('wo'), stack('bo')
    w1, b1 = stack('w1'), stack('b1')
    w2, b2 = stack('w2'), stack('b2')
    g1, be1 = stack('g1'), stack('be1')
    g2, be2 = stack('g2'), stack('be2')

    # host-side bf16 cast for every MXU weight: halves the per-step weight DMA
    # and removes in-kernel casts (kernel casts activations only).
    wqkv = wqkv.astype(jnp.bfloat16)
    wo = wo.astype(jnp.bfloat16)
    w1 = w1.astype(jnp.bfloat16)
    w2 = w2.astype(jnp.bfloat16)

    # ----- additive key-padding bias (finite, NaN-safe) -----
    if mask is None:
        bias = jnp.zeros((B, 1, S), jnp.float32)
    else:
        bias = jnp.where(mask == 0, -1e30, 0.0).astype(jnp.float32).reshape(B, 1, S)

    def wspec(shape):
        nd = len(shape)
        return pl.BlockSpec((1,) + tuple(shape[1:]),
                            lambda b, l, _nd=nd: (l,) + (0,) * (_nd - 1))

    kern = functools.partial(encoder_kernel, nhead=nhead, eps=eps)

    grid_spec = pltpu.PrefetchScalarGridSpec(
        num_scalar_prefetch=0,
        grid=(B, L),                       # batch parallel, layers sequential
        in_specs=[
            pl.BlockSpec((1, 1, S), lambda b, l: (b, 0, 0)),   # key-padding bias
            pl.BlockSpec((1, S, D), lambda b, l: (b, 0, 0)),   # x
            wspec(wqkv.shape), wspec(bqkv.shape),
            wspec(wo.shape), wspec(bo.shape),
            wspec(w1.shape), wspec(b1.shape),
            wspec(w2.shape), wspec(b2.shape),
            wspec(g1.shape), wspec(be1.shape),
            wspec(g2.shape), wspec(be2.shape),
        ],
        out_specs=pl.BlockSpec((1, S, D), lambda b, l: (b, 0, 0)),
        scratch_shapes=[pltpu.VMEM((S, D), jnp.float32)],      # resident activation
    )

    return pl.pallas_call(
        kern,
        out_shape=jax.ShapeDtypeStruct((B, S, D), jnp.float32),
        grid_spec=grid_spec,
        compiler_params=pltpu.CompilerParams(
            dimension_semantics=("parallel", "arbitrary"),
            vmem_limit_bytes=_vmem_limit_bytes(S, D, dff)),
    )(bias, x,
      wqkv, bqkv, wo, bo, w1, b1, w2, b2, g1, be1, g2, be2)


# ---------------- pure-JAX f32 reference (for a sanity check) ----------------
def _reference(x, mask, params, nhead, eps=1e-5):
    B, S, D = x.shape
    hd = D // nhead
    if mask is None:
        bias = jnp.zeros((B, 1, 1, S), jnp.float32)
    else:
        bias = jnp.where(mask == 0, -1e30, 0.0)[:, None, None, :].astype(jnp.float32)
    for p in params:
        h = _layer_norm(x, p['g1'], p['be1'], eps)
        qkv = h @ p['wqkv'] + p['bqkv']
        q, k, v = jnp.split(qkv, 3, axis=-1)
        q = q.reshape(B, S, nhead, hd)
        k = k.reshape(B, S, nhead, hd)
        v = v.reshape(B, S, nhead, hd)
        s = jnp.einsum('bqhd,bkhd->bhqk', q / math.sqrt(hd), k) + bias
        pr = jax.nn.softmax(s, axis=-1)
        ctx = jnp.einsum('bhqk,bkhd->bqhd', pr, v).reshape(B, S, D)
        x = x + (ctx @ p['wo'] + p['bo'])
        h2 = _layer_norm(x, p['g2'], p['be2'], eps)
        f = _gelu_exact(h2 @ p['w1'] + p['b1']) @ p['w2'] + p['b2']
        x = x + f
    return x


def init_params(key, num_layers, d_model, dff):
    params = []
    for i in range(num_layers):
        keys = jax.random.split(jax.random.fold_in(key, i), 4)
        params.append(dict(
            wqkv=0.05 * jax.random.normal(keys[0], (d_model, 3 * d_model), jnp.float32),
            bqkv=jnp.zeros((1, 3 * d_model), jnp.float32),
            wo=0.05 * jax.random.normal(keys[1], (d_model, d_model), jnp.float32),
            bo=jnp.zeros((1, d_model), jnp.float32),
            w1=0.05 * jax.random.normal(keys[2], (d_model, dff), jnp.float32),
            b1=jnp.zeros((1, dff), jnp.float32),
            w2=0.05 * jax.random.normal(keys[3], (dff, d_model), jnp.float32),
            b2=jnp.zeros((1, d_model), jnp.float32),
            g1=jnp.ones((1, d_model), jnp.float32),
            be1=jnp.zeros((1, d_model), jnp.float32),
            g2=jnp.ones((1, d_model), jnp.float32),
            be2=jnp.zeros((1, d_model), jnp.float32),
        ))
    return params


if __name__ == "__main__":
    # small shapes: batch=2, seq=8, d_model=32, nhead=4, dim_feedforward=64, num_layers=2
    B, S, D, H, DFF, L = 2, 8, 32, 4, 64, 2
    key = jax.random.PRNGKey(0)
    kx, kp = jax.random.split(key)
    x = jax.random.normal(kx, (B, S, D), jnp.float32)
    # nonzero = valid token; zero out the last two tokens of batch 1 to exercise
    # key-padding masking (no row is fully masked).
    mask = jnp.ones((B, S), jnp.float32).at[1, -2:].set(0.0)
    params = init_params(kp, L, D, DFF)

    out = vanilla_transformer_encoder(x, mask, params, nhead=H)
    out = jax.block_until_ready(out)

    ref = _reference(x, mask, params, H)
    assert out.shape == (B, S, D)
    assert bool(jnp.all(jnp.isfinite(out)))
    # bf16 MXU inputs (f32 accumulation) => compare vs the f32 reference at 1e-2.
    assert jnp.allclose(out, ref, atol=1e-2, rtol=1e-2), \
        f"max abs diff {float(jnp.max(jnp.abs(out - ref)))}"
    print("KERNEL_OK")
</pallas_src>

<mosaic_0001>
module attributes {stable_mosaic.version = 11 : i64} {
  func.func @encoder_kernel(%arg0: i32, %arg1: i32, %arg2: memref<1x1x8xf32, #tpu.memory_space<vmem>>, %arg3: memref<1x8x32xf32, #tpu.memory_space<vmem>>, %arg4: memref<1x32x96xbf16, #tpu.memory_space<vmem>>, %arg5: memref<1x1x96xf32, #tpu.memory_space<vmem>>, %arg6: memref<1x32x32xbf16, #tpu.memory_space<vmem>>, %arg7: memref<1x1x32xf32, #tpu.memory_space<vmem>>, %arg8: memref<1x32x64xbf16, #tpu.memory_space<vmem>>, %arg9: memref<1x1x64xf32, #tpu.memory_space<vmem>>, %arg10: memref<1x64x32xbf16, #tpu.memory_space<vmem>>, %arg11: memref<1x1x32xf32, #tpu.memory_space<vmem>>, %arg12: memref<1x1x32xf32, #tpu.memory_space<vmem>>, %arg13: memref<1x1x32xf32, #tpu.memory_space<vmem>>, %arg14: memref<1x1x32xf32, #tpu.memory_space<vmem>>, %arg15: memref<1x1x32xf32, #tpu.memory_space<vmem>>, %arg16: memref<1x8x32xf32, #tpu.memory_space<vmem>>, %arg17: memref<8x32xf32, #tpu.memory_space<vmem>>) attributes {dimension_semantics = [#tpu.dimension_semantics<parallel>, #tpu.dimension_semantics<arbitrary>], iteration_bounds = array<i64: 2, 2>, scalar_prefetch = 0 : i64, scratch_operands = 1 : i64, tpu.core_type = #tpu.core_type<tc>, window_params = [{transform_indices = @transform_0, window_bounds = array<i64: 1, 1, 8>}, {transform_indices = @transform_1, window_bounds = array<i64: 1, 8, 32>}, {transform_indices = @transform_2, window_bounds = array<i64: 1, 32, 96>}, {transform_indices = @transform_3, window_bounds = array<i64: 1, 1, 96>}, {transform_indices = @transform_4, window_bounds = array<i64: 1, 32, 32>}, {transform_indices = @transform_5, window_bounds = array<i64: 1, 1, 32>}, {transform_indices = @transform_6, window_bounds = array<i64: 1, 32, 64>}, {transform_indices = @transform_7, window_bounds = array<i64: 1, 1, 64>}, {transform_indices = @transform_8, window_bounds = array<i64: 1, 64, 32>}, {transform_indices = @transform_9, window_bounds = array<i64: 1, 1, 32>}, {transform_indices = @transform_10, window_bounds = array<i64: 1, 1, 32>}, {transform_indices = @transform_11, window_bounds = array<i64: 1, 1, 32>}, {transform_indices = @transform_12, window_bounds = array<i64: 1, 1, 32>}, {transform_indices = @transform_13, window_bounds = array<i64: 1, 1, 32>}, {transform_indices = @transform_14, window_bounds = array<i64: 1, 8, 32>}]} {
    %c0_i32 = arith.constant 0 : i32
    %0 = arith.cmpi eq, %arg1, %c0_i32 : i32
    %1 = arith.extui %0 : i1 to i32
    %c0_i32_0 = arith.constant 0 : i32
    %2 = arith.cmpi ne, %1, %c0_i32_0 : i32
    scf.if %2 {
      %c0_76 = arith.constant 0 : index
      %c0_77 = arith.constant 0 : index
      %c0_78 = arith.constant 0 : index
      %187 = vector.load %arg3[%c0_76, %c0_77, %c0_78] : memref<1x8x32xf32, #tpu.memory_space<vmem>>, vector<1x8x32xf32>
      %188 = vector.shape_cast %187 : vector<1x8x32xf32> to vector<8x32xf32>
      %c0_79 = arith.constant 0 : index
      %c0_80 = arith.constant 0 : index
      %189 = vector.load %arg17[%c0_79, %c0_80] : memref<8x32xf32, #tpu.memory_space<vmem>>, vector<8x32xf32>
      tpu.vector_store %arg17[%c0_79, %c0_80], %188 {strides = array<i32>} : memref<8x32xf32, #tpu.memory_space<vmem>>, vector<8x32xf32>,
    } else {
    }
    %c0 = arith.constant 0 : index
    %c0_1 = arith.constant 0 : index
    %3 = vector.load %arg17[%c0, %c0_1] : memref<8x32xf32, #tpu.memory_space<vmem>>, vector<8x32xf32>
    %c0_2 = arith.constant 0 : index
    %c0_3 = arith.constant 0 : index
    %c0_4 = arith.constant 0 : index
    %4 = vector.load %arg2[%c0_2, %c0_3, %c0_4] : memref<1x1x8xf32, #tpu.memory_space<vmem>>, vector<1x1x8xf32>
    %5 = vector.shape_cast %4 : vector<1x1x8xf32> to vector<1x8xf32>
    %6 = vector.shape_cast %5 : vector<1x8xf32> to vector<1x8xf32>
    %7 = vector.broadcast %6 : vector<1x8xf32> to vector<8x8xf32>
    %c0_5 = arith.constant 0 : index
    %c0_6 = arith.constant 0 : index
    %c0_7 = arith.constant 0 : index
    %8 = vector.load %arg12[%c0_5, %c0_6, %c0_7] : memref<1x1x32xf32, #tpu.memory_space<vmem>>, vector<1x1x32xf32>
    %9 = vector.shape_cast %8 : vector<1x1x32xf32> to vector<1x32xf32>
    %c0_8 = arith.constant 0 : index
    %c0_9 = arith.constant 0 : index
    %c0_10 = arith.constant 0 : index
    %10 = vector.load %arg13[%c0_8, %c0_9, %c0_10] : memref<1x1x32xf32, #tpu.memory_space<vmem>>, vector<1x1x32xf32>
    %11 = vector.shape_cast %10 : vector<1x1x32xf32> to vector<1x32xf32>
    %cst = arith.constant dense<0.000000e+00> : vector<8xf32>
    %12 = vector.multi_reduction <add>, %3, %cst [1] : vector<8x32xf32> to vector<8xf32>
    %13 = vector.shape_cast %12 : vector<8xf32> to vector<8x1xf32>
    %cst_11 = arith.constant 3.200000e+01 : f32
    %14 = vector.broadcast %cst_11 : f32 to vector<8x1xf32>
    %15 = arith.divf %13, %14 : vector<8x1xf32>
    %16 = vector.broadcast %15 : vector<8x1xf32> to vector<8x32xf32>
    %17 = arith.subf %3, %16 : vector<8x32xf32>
    %18 = arith.mulf %17, %17 : vector<8x32xf32>
    %cst_12 = arith.constant dense<0.000000e+00> : vector<8xf32>
    %19 = vector.multi_reduction <add>, %18, %cst_12 [1] : vector<8x32xf32> to vector<8xf32>
    %20 = vector.shape_cast %19 : vector<8xf32> to vector<8x1xf32>
    %cst_13 = arith.constant 3.200000e+01 : f32
    %21 = vector.broadcast %cst_13 : f32 to vector<8x1xf32>
    %22 = arith.divf %20, %21 : vector<8x1xf32>
    %23 = vector.broadcast %15 : vector<8x1xf32> to vector<8x32xf32>
    %24 = arith.subf %3, %23 : vector<8x32xf32>
    %cst_14 = arith.constant 9.99999974E-6 : f32
    %25 = vector.broadcast %cst_14 : f32 to vector<8x1xf32>
    %26 = arith.addf %22, %25 : vector<8x1xf32>
    %27 = math.rsqrt %26 : vector<8x1xf32>
    %28 = vector.broadcast %27 : vector<8x1xf32> to vector<8x32xf32>
    %29 = arith.mulf %24, %28 : vector<8x32xf32>
    %30 = vector.broadcast %9 : vector<1x32xf32> to vector<8x32xf32>
    %31 = arith.mulf %29, %30 : vector<8x32xf32>
    %32 = vector.broadcast %11 : vector<1x32xf32> to vector<8x32xf32>
    %33 = arith.addf %31, %32 : vector<8x32xf32>
    %34 = arith.truncf %33 : vector<8x32xf32> to vector<8x32xbf16>
    %c0_15 = arith.constant 0 : index
    %c0_16 = arith.constant 0 : index
    %c0_17 = arith.constant 0 : index
    %35 = vector.load %arg4[%c0_15, %c0_16, %c0_17] : memref<1x32x96xbf16, #tpu.memory_space<vmem>>, vector<1x32x96xbf16>
    %36 = vector.shape_cast %35 : vector<1x32x96xbf16> to vector<32x96xbf16>
    %cst_18 = arith.constant dense<0.000000e+00> : vector<8x96xf32>
    %37 = tpu.matmul %34, %36, %cst_18 {dimension_numbers = #tpu.dot_dimension_numbers<[1], [0], [0], [1], [0, 0, 1, 1], [], []>} : vector<8x32xbf16>, vector<32x96xbf16>, vector<8x96xf32> -> vector<8x96xf32>
    %c0_19 = arith.constant 0 : index
    %c0_20 = arith.constant 0 : index
    %c0_21 = arith.constant 0 : index
    %38 = vector.load %arg5[%c0_19, %c0_20, %c0_21] : memref<1x1x96xf32, #tpu.memory_space<vmem>>, vector<1x1x96xf32>
    %39 = vector.shape_cast %38 : vector<1x1x96xf32> to vector<1x96xf32>
    %40 = vector.broadcast %39 : vector<1x96xf32> to vector<8x96xf32>
    %41 = arith.addf %37, %40 : vector<8x96xf32>
    %42 = vector.extract_strided_slice %41 {offsets = [0, 0], sizes = [8, 8], strides = [1, 1]} : vector<8x96xf32> to vector<8x8xf32>
    %43 = vector.extract_strided_slice %41 {offsets = [0, 32], sizes = [8, 8], strides = [1, 1]} : vector<8x96xf32> to vector<8x8xf32>
    %44 = vector.extract_strided_slice %41 {offsets = [0, 64], sizes = [8, 8], strides = [1, 1]} : vector<8x96xf32> to vector<8x8xf32>
    %45 = arith.truncf %42 : vector<8x8xf32> to vector<8x8xbf16>
    %46 = arith.truncf %43 : vector<8x8xf32> to vector<8x8xbf16>
    "tpu.trace_start"() <{level = 10 : i32, message = "qd,kd->qk"}> : () -> ()
    %cst_22 = arith.constant dense<0.000000e+00> : vector<8x8xf32>
    %47 = tpu.matmul %45, %46, %cst_22 {dimension_numbers = #tpu.dot_dimension_numbers<[1], [1], [0], [0], [0, 0, 1, 0], [], []>} : vector<8x8xbf16>, vector<8x8xbf16>, vector<8x8xf32> -> vector<8x8xf32>
    "tpu.trace_stop"() : () -> ()
    %48 = arith.addf %47, %7 : vector<8x8xf32>
    %cst_23 = arith.constant dense<0xFF800000> : vector<8xf32>
    %49 = vector.multi_reduction <maximumf>, %48, %cst_23 [1] : vector<8x8xf32> to vector<8xf32>
    %50 = vector.shape_cast %49 : vector<8xf32> to vector<8x1xf32>
    %51 = vector.broadcast %50 : vector<8x1xf32> to vector<8x8xf32>
    %52 = arith.subf %48, %51 : vector<8x8xf32>
    %53 = math.exp %52 : vector<8x8xf32>
    %cst_24 = arith.constant dense<0.000000e+00> : vector<8xf32>
    %54 = vector.multi_reduction <add>, %53, %cst_24 [1] : vector<8x8xf32> to vector<8xf32>
    %55 = vector.shape_cast %54 : vector<8xf32> to vector<8x1xf32>
    %56 = tpu.reciprocal %55 {approx = true} : vector<8x1xf32> -> vector<8x1xf32>
    %57 = vector.broadcast %56 : vector<8x1xf32> to vector<8x8xf32>
    %58 = arith.mulf %53, %57 : vector<8x8xf32>
    %59 = arith.truncf %58 : vector<8x8xf32> to vector<8x8xbf16>
    %60 = arith.truncf %44 : vector<8x8xf32> to vector<8x8xbf16>
    %cst_25 = arith.constant dense<0.000000e+00> : vector<8x8xf32>
    %61 = tpu.matmul %59, %60, %cst_25 {dimension_numbers = #tpu.dot_dimension_numbers<[1], [0], [0], [1], [0, 0, 1, 1], [], []>} : vector<8x8xbf16>, vector<8x8xbf16>, vector<8x8xf32> -> vector<8x8xf32>
    %62 = vector.extract_strided_slice %41 {offsets = [0, 8], sizes = [8, 8], strides = [1, 1]} : vector<8x96xf32> to vector<8x8xf32>
    %63 = vector.extract_strided_slice %41 {offsets = [0, 40], sizes = [8, 8], strides = [1, 1]} : vector<8x96xf32> to vector<8x8xf32>
    %64 = vector.extract_strided_slice %41 {offsets = [0, 72], sizes = [8, 8], strides = [1, 1]} : vector<8x96xf32> to vector<8x8xf32>
    %65 = arith.truncf %62 : vector<8x8xf32> to vector<8x8xbf16>
    %66 = arith.truncf %63 : vector<8x8xf32> to vector<8x8xbf16>
    "tpu.trace_start"() <{level = 10 : i32, message = "qd,kd->qk"}> : () -> ()
    %cst_26 = arith.constant dense<0.000000e+00> : vector<8x8xf32>
    %67 = tpu.matmul %65, %66, %cst_26 {dimension_numbers = #tpu.dot_dimension_numbers<[1], [1], [0], [0], [0, 0, 1, 0], [], []>} : vector<8x8xbf16>, vector<8x8xbf16>, vector<8x8xf32> -> vector<8x8xf32>
    "tpu.trace_stop"() : () -> ()
    %68 = arith.addf %67, %7 : vector<8x8xf32>
    %cst_27 = arith.constant dense<0xFF800000> : vector<8xf32>
    %69 = vector.multi_reduction <maximumf>, %68, %cst_27 [1] : vector<8x8xf32> to vector<8xf32>
    %70 = vector.shape_cast %69 : vector<8xf32> to vector<8x1xf32>
    %71 = vector.broadcast %70 : vector<8x1xf32> to vector<8x8xf32>
    %72 = arith.subf %68, %71 : vector<8x8xf32>
    %73 = math.exp %72 : vector<8x8xf32>
    %cst_28 = arith.constant dense<0.000000e+00> : vector<8xf32>
    %74 = vector.multi_reduction <add>, %73, %cst_28 [1] : vector<8x8xf32> to vector<8xf32>
    %75 = vector.shape_cast %74 : vector<8xf32> to vector<8x1xf32>
    %76 = tpu.reciprocal %75 {approx = true} : vector<8x1xf32> -> vector<8x1xf32>
    %77 = vector.broadcast %76 : vector<8x1xf32> to vector<8x8xf32>
    %78 = arith.mulf %73, %77 : vector<8x8xf32>
    %79 = arith.truncf %78 : vector<8x8xf32> to vector<8x8xbf16>
    %80 = arith.truncf %64 : vector<8x8xf32> to vector<8x8xbf16>
    %cst_29 = arith.constant dense<0.000000e+00> : vector<8x8xf32>
    %81 = tpu.matmul %79, %80, %cst_29 {dimension_numbers = #tpu.dot_dimension_numbers<[1], [0], [0], [1], [0, 0, 1, 1], [], []>} : vector<8x8xbf16>, vector<8x8xbf16>, vector<8x8xf32> -> vector<8x8xf32>
    %82 = vector.extract_strided_slice %41 {offsets = [0, 16], sizes = [8, 8], strides = [1, 1]} : vector<8x96xf32> to vector<8x8xf32>
    %83 = vector.extract_strided_slice %41 {offsets = [0, 48], sizes = [8, 8], strides = [1, 1]} : vector<8x96xf32> to vector<8x8xf32>
    %84 = vector.extract_strided_slice %41 {offsets = [0, 80], sizes = [8, 8], strides = [1, 1]} : vector<8x96xf32> to vector<8x8xf32>
    %85 = arith.truncf %82 : vector<8x8xf32> to vector<8x8xbf16>
    %86 = arith.truncf %83 : vector<8x8xf32> to vector<8x8xbf16>
    "tpu.trace_start"() <{level = 10 : i32, message = "qd,kd->qk"}> : () -> ()
    %cst_30 = arith.constant dense<0.000000e+00> : vector<8x8xf32>
    %87 = tpu.matmul %85, %86, %cst_30 {dimension_numbers = #tpu.dot_dimension_numbers<[1], [1], [0], [0], [0, 0, 1, 0], [], []>} : vector<8x8xbf16>, vector<8x8xbf16>, vector<8x8xf32> -> vector<8x8xf32>
    "tpu.trace_stop"() : () -> ()
    %88 = arith.addf %87, %7 : vector<8x8xf32>
    %cst_31 = arith.constant dense<0xFF800000> : vector<8xf32>
    %89 = vector.multi_reduction <maximumf>, %88, %cst_31 [1] : vector<8x8xf32> to vector<8xf32>
    %90 = vector.shape_cast %89 : vector<8xf32> to vector<8x1xf32>
    %91 = vector.broadcast %90 : vector<8x1xf32> to vector<8x8xf32>
    %92 = arith.subf %88, %91 : vector<8x8xf32>
    %93 = math.exp %92 : vector<8x8xf32>
    %cst_32 = arith.constant dense<0.000000e+00> : vector<8xf32>
    %94 = vector.multi_reduction <add>, %93, %cst_32 [1] : vector<8x8xf32> to vector<8xf32>
    %95 = vector.shape_cast %94 : vector<8xf32> to vector<8x1xf32>
    %96 = tpu.reciprocal %95 {approx = true} : vector<8x1xf32> -> vector<8x1xf32>
    %97 = vector.broadcast %96 : vector<8x1xf32> to vector<8x8xf32>
    %98 = arith.mulf %93, %97 : vector<8x8xf32>
    %99 = arith.truncf %98 : vector<8x8xf32> to vector<8x8xbf16>
    %100 = arith.truncf %84 : vector<8x8xf32> to vector<8x8xbf16>
    %cst_33 = arith.constant dense<0.000000e+00> : vector<8x8xf32>
    %101 = tpu.matmul %99, %100, %cst_33 {dimension_numbers = #tpu.dot_dimension_numbers<[1], [0], [0], [1], [0, 0, 1, 1], [], []>} : vector<8x8xbf16>, vector<8x8xbf16>, vector<8x8xf32> -> vector<8x8xf32>
    %102 = vector.extract_strided_slice %41 {offsets = [0, 24], sizes = [8, 8], strides = [1, 1]} : vector<8x96xf32> to vector<8x8xf32>
    %103 = vector.extract_strided_slice %41 {offsets = [0, 56], sizes = [8, 8], strides = [1, 1]} : vector<8x96xf32> to vector<8x8xf32>
    %104 = vector.extract_strided_slice %41 {offsets = [0, 88], sizes = [8, 8], strides = [1, 1]} : vector<8x96xf32> to vector<8x8xf32>
    %105 = arith.truncf %102 : vector<8x8xf32> to vector<8x8xbf16>
    %106 = arith.truncf %103 : vector<8x8xf32> to vector<8x8xbf16>
    "tpu.trace_start"() <{level = 10 : i32, message = "qd,kd->qk"}> : () -> ()
    %cst_34 = arith.constant dense<0.000000e+00> : vector<8x8xf32>
    %107 = tpu.matmul %105, %106, %cst_34 {dimension_numbers = #tpu.dot_dimension_numbers<[1], [1], [0], [0], [0, 0, 1, 0], [], []>} : vector<8x8xbf16>, vector<8x8xbf16>, vector<8x8xf32> -> vector<8x8xf32>
    "tpu.trace_stop"() : () -> ()
    %108 = arith.addf %107, %7 : vector<8x8xf32>
    %cst_35 = arith.constant dense<0xFF800000> : vector<8xf32>
    %109 = vector.multi_reduction <maximumf>, %108, %cst_35 [1] : vector<8x8xf32> to vector<8xf32>
    %110 = vector.shape_cast %109 : vector<8xf32> to vector<8x1xf32>
    %111 = vector.broadcast %110 : vector<8x1xf32> to vector<8x8xf32>
    %112 = arith.subf %108, %111 : vector<8x8xf32>
    %113 = math.exp %112 : vector<8x8xf32>
    %cst_36 = arith.constant dense<0.000000e+00> : vector<8xf32>
    %114 = vector.multi_reduction <add>, %113, %cst_36 [1] : vector<8x8xf32> to vector<8xf32>
    %115 = vector.shape_cast %114 : vector<8xf32> to vector<8x1xf32>
    %116 = tpu.reciprocal %115 {approx = true} : vector<8x1xf32> -> vector<8x1xf32>
    %117 = vector.broadcast %116 : vector<8x1xf32> to vector<8x8xf32>
    %118 = arith.mulf %113, %117 : vector<8x8xf32>
    %119 = arith.truncf %118 : vector<8x8xf32> to vector<8x8xbf16>
    %120 = arith.truncf %104 : vector<8x8xf32> to vector<8x8xbf16>
    %cst_37 = arith.constant dense<0.000000e+00> : vector<8x8xf32>
    %121 = tpu.matmul %119, %120, %cst_37 {dimension_numbers = #tpu.dot_dimension_numbers<[1], [0], [0], [1], [0, 0, 1, 1], [], []>} : vector<8x8xbf16>, vector<8x8xbf16>, vector<8x8xf32> -> vector<8x8xf32>
    %122 = tpu.concatenate %61, %81, %101, %121 in 1 : vector<8x8xf32>, vector<8x8xf32>, vector<8x8xf32>, vector<8x8xf32> -> vector<8x32xf32>
    %123 = arith.truncf %122 : vector<8x32xf32> to vector<8x32xbf16>
    %c0_38 = arith.constant 0 : index
    %c0_39 = arith.constant 0 : index
    %c0_40 = arith.constant 0 : index
    %124 = vector.load %arg6[%c0_38, %c0_39, %c0_40] : memref<1x32x32xbf16, #tpu.memory_space<vmem>>, vector<1x32x32xbf16>
    %125 = vector.shape_cast %124 : vector<1x32x32xbf16> to vector<32x32xbf16>
    %cst_41 = arith.constant dense<0.000000e+00> : vector<8x32xf32>
    %126 = tpu.matmul %123, %125, %cst_41 {dimension_numbers = #tpu.dot_dimension_numbers<[1], [0], [0], [1], [0, 0, 1, 1], [], []>} : vector<8x32xbf16>, vector<32x32xbf16>, vector<8x32xf32> -> vector<8x32xf32>
    %c0_42 = arith.constant 0 : index
    %c0_43 = arith.constant 0 : index
    %c0_44 = arith.constant 0 : index
    %127 = vector.load %arg7[%c0_42, %c0_43, %c0_44] : memref<1x1x32xf32, #tpu.memory_space<vmem>>, vector<1x1x32xf32>
    %128 = vector.shape_cast %127 : vector<1x1x32xf32> to vector<1x32xf32>
    %129 = vector.broadcast %128 : vector<1x32xf32> to vector<8x32xf32>
    %130 = arith.addf %126, %129 : vector<8x32xf32>
    %131 = arith.addf %3, %130 : vector<8x32xf32>
    %c0_45 = arith.constant 0 : index
    %c0_46 = arith.constant 0 : index
    %c0_47 = arith.constant 0 : index
    %132 = vector.load %arg14[%c0_45, %c0_46, %c0_47] : memref<1x1x32xf32, #tpu.memory_space<vmem>>, vector<1x1x32xf32>
    %133 = vector.shape_cast %132 : vector<1x1x32xf32> to vector<1x32xf32>
    %c0_48 = arith.constant 0 : index
    %c0_49 = arith.constant 0 : index
    %c0_50 = arith.constant 0 : index
    %134 = vector.load %arg15[%c0_48, %c0_49, %c0_50] : memref<1x1x32xf32, #tpu.memory_space<vmem>>, vector<1x1x32xf32>
    %135 = vector.shape_cast %134 : vector<1x1x32xf32> to vector<1x32xf32>
    %cst_51 = arith.constant dense<0.000000e+00> : vector<8xf32>
    %136 = vector.multi_reduction <add>, %131, %cst_51 [1] : vector<8x32xf32> to vector<8xf32>
    %137 = vector.shape_cast %136 : vector<8xf32> to vector<8x1xf32>
    %cst_52 = arith.constant 3.200000e+01 : f32
    %138 = vector.broadcast %cst_52 : f32 to vector<8x1xf32>
    %139 = arith.divf %137, %138 : vector<8x1xf32>
    %140 = vector.broadcast %139 : vector<8x1xf32> to vector<8x32xf32>
    %141 = arith.subf %131, %140 : vector<8x32xf32>
    %142 = arith.mulf %141, %141 : vector<8x32xf32>
    %cst_53 = arith.constant dense<0.000000e+00> : vector<8xf32>
    %143 = vector.multi_reduction <add>, %142, %cst_53 [1] : vector<8x32xf32> to vector<8xf32>
    %144 = vector.shape_cast %143 : vector<8xf32> to vector<8x1xf32>
    %cst_54 = arith.constant 3.200000e+01 : f32
    %145 = vector.broadcast %cst_54 : f32 to vector<8x1xf32>
    %146 = arith.divf %144, %145 : vector<8x1xf32>
    %147 = vector.broadcast %139 : vector<8x1xf32> to vector<8x32xf32>
    %148 = arith.subf %131, %147 : vector<8x32xf32>
    %cst_55 = arith.constant 9.99999974E-6 : f32
    %149 = vector.broadcast %cst_55 : f32 to vector<8x1xf32>
    %150 = arith.addf %146, %149 : vector<8x1xf32>
    %151 = math.rsqrt %150 : vector<8x1xf32>
    %152 = vector.broadcast %151 : vector<8x1xf32> to vector<8x32xf32>
    %153 = arith.mulf %148, %152 : vector<8x32xf32>
    %154 = vector.broadcast %133 : vector<1x32xf32> to vector<8x32xf32>
    %155 = arith.mulf %153, %154 : vector<8x32xf32>
    %156 = vector.broadcast %135 : vector<1x32xf32> to vector<8x32xf32>
    %157 = arith.addf %155, %156 : vector<8x32xf32>
    %158 = arith.truncf %157 : vector<8x32xf32> to vector<8x32xbf16>
    %c0_56 = arith.constant 0 : index
    %c0_57 = arith.constant 0 : index
    %c0_58 = arith.constant 0 : index
    %159 = vector.load %arg8[%c0_56, %c0_57, %c0_58] : memref<1x32x64xbf16, #tpu.memory_space<vmem>>, vector<1x32x64xbf16>
    %160 = vector.shape_cast %159 : vector<1x32x64xbf16> to vector<32x64xbf16>
    %cst_59 = arith.constant dense<0.000000e+00> : vector<8x64xf32>
    %161 = tpu.matmul %158, %160, %cst_59 {dimension_numbers = #tpu.dot_dimension_numbers<[1], [0], [0], [1], [0, 0, 1, 1], [], []>} : vector<8x32xbf16>, vector<32x64xbf16>, vector<8x64xf32> -> vector<8x64xf32>
    %c0_60 = arith.constant 0 : index
    %c0_61 = arith.constant 0 : index
    %c0_62 = arith.constant 0 : index
    %162 = vector.load %arg9[%c0_60, %c0_61, %c0_62] : memref<1x1x64xf32, #tpu.memory_space<vmem>>, vector<1x1x64xf32>
    %163 = vector.shape_cast %162 : vector<1x1x64xf32> to vector<1x64xf32>
    %164 = vector.broadcast %163 : vector<1x64xf32> to vector<8x64xf32>
    %165 = arith.addf %161, %164 : vector<8x64xf32>
    %cst_63 = arith.constant 5.000000e-01 : f32
    %166 = vector.broadcast %cst_63 : f32 to vector<8x64xf32>
    %167 = arith.mulf %166, %165 : vector<8x64xf32>
    %cst_64 = arith.constant 0.707106769 : f32
    %168 = vector.broadcast %cst_64 : f32 to vector<8x64xf32>
    %169 = arith.mulf %165, %168 : vector<8x64xf32>
    %170 = math.erf %169 : vector<8x64xf32>
    %cst_65 = arith.constant 1.000000e+00 : f32
    %171 = vector.broadcast %cst_65 : f32 to vector<8x64xf32>
    %172 = arith.addf %171, %170 : vector<8x64xf32>
    %173 = arith.mulf %167, %172 : vector<8x64xf32>
    %174 = arith.truncf %173 : vector<8x64xf32> to vector<8x64xbf16>
    %c0_66 = arith.constant 0 : index
    %c0_67 = arith.constant 0 : index
    %c0_68 = arith.constant 0 : index
    %175 = vector.load %arg10[%c0_66, %c0_67, %c0_68] : memref<1x64x32xbf16, #tpu.memory_space<vmem>>, vector<1x64x32xbf16>
    %176 = vector.shape_cast %175 : vector<1x64x32xbf16> to vector<64x32xbf16>
    %cst_69 = arith.constant dense<0.000000e+00> : vector<8x32xf32>
    %177 = tpu.matmul %174, %176, %cst_69 {dimension_numbers = #tpu.dot_dimension_numbers<[1], [0], [0], [1], [0, 0, 1, 1], [], []>} : vector<8x64xbf16>, vector<64x32xbf16>, vector<8x32xf32> -> vector<8x32xf32>
    %c0_70 = arith.constant 0 : index
    %c0_71 = arith.constant 0 : index
    %c0_72 = arith.constant 0 : index
    %178 = vector.load %arg11[%c0_70, %c0_71, %c0_72] : memref<1x1x32xf32, #tpu.memory_space<vmem>>, vector<1x1x32xf32>
    %179 = vector.shape_cast %178 : vector<1x1x32xf32> to vector<1x32xf32>
    %180 = vector.broadcast %179 : vector<1x32xf32> to vector<8x32xf32>
    %181 = arith.addf %177, %180 : vector<8x32xf32>
    %182 = arith.addf %131, %181 : vector<8x32xf32>
    %c0_73 = arith.constant 0 : index
    %c0_74 = arith.constant 0 : index
    %183 = vector.load %arg17[%c0_73, %c0_74] : memref<8x32xf32, #tpu.memory_space<vmem>>, vector<8x32xf32>
    tpu.vector_store %arg17[%c0_73, %c0_74], %182 {strides = array<i32>} : memref<8x32xf32, #tpu.memory_space<vmem>>, vector<8x32xf32>,
    %c1_i32 = arith.constant 1 : i32
    %184 = arith.cmpi eq, %arg1, %c1_i32 : i32
    %185 = arith.extui %184 : i1 to i32
    %c0_i32_75 = arith.constant 0 : i32
    %186 = arith.cmpi ne, %185, %c0_i32_75 : i32
    scf.if %186 {
      %c0_76 = arith.constant 0 : index
      %c0_77 = arith.constant 0 : index
      %c0_78 = arith.constant 0 : index
      %187 = vector.load %arg16[%c0_76, %c0_77, %c0_78] : memref<1x8x32xf32, #tpu.memory_space<vmem>>, vector<1x8x32xf32>
      %188 = vector.shape_cast %187 : vector<1x8x32xf32> to vector<8x32xf32>
      %189 = vector.shape_cast %182 : vector<8x32xf32> to vector<1x8x32xf32>
      tpu.vector_store %arg16[%c0_76, %c0_77, %c0_78], %189 {strides = array<i32>} : memref<1x8x32xf32, #tpu.memory_space<vmem>>, vector<1x8x32xf32>,
    } else {
    }
    return
  }
  func.func @transform_0(%arg0: i32, %arg1: i32) -> (i32, i32, i32) {
    %c0_i32 = arith.constant 0 : i32
    %c0_i32_0 = arith.constant 0 : i32
    %c0_i32_1 = arith.constant 0 : i32
    return %arg0, %c0_i32, %c0_i32_0 : i32, i32, i32
  }
  func.func @transform_1(%arg0: i32, %arg1: i32) -> (i32, i32, i32) {
    %c0_i32 = arith.constant 0 : i32
    %c0_i32_0 = arith.constant 0 : i32
    %c0_i32_1 = arith.constant 0 : i32
    return %arg0, %c0_i32, %c0_i32_0 : i32, i32, i32
  }
  func.func @transform_2(%arg0: i32, %arg1: i32) -> (i32, i32, i32) {
    %c0_i32 = arith.constant 0 : i32
    %c0_i32_0 = arith.constant 0 : i32
    %c0_i32_1 = arith.constant 0 : i32
    return %arg1, %c0_i32, %c0_i32_0 : i32, i32, i32
  }
  func.func @transform_3(%arg0: i32, %arg1: i32) -> (i32, i32, i32) {
    %c0_i32 = arith.constant 0 : i32
    %c0_i32_0 = arith.constant 0 : i32
    %c0_i32_1 = arith.constant 0 : i32
    return %arg1, %c0_i32, %c0_i32_0 : i32, i32, i32
  }
  func.func @transform_4(%arg0: i32, %arg1: i32) -> (i32, i32, i32) {
    %c0_i32 = arith.constant 0 : i32
    %c0_i32_0 = arith.constant 0 : i32
    %c0_i32_1 = arith.constant 0 : i32
    return %arg1, %c0_i32, %c0_i32_0 : i32, i32, i32
  }
  func.func @transform_5(%arg0: i32, %arg1: i32) -> (i32, i32, i32) {
    %c0_i32 = arith.constant 0 : i32
    %c0_i32_0 = arith.constant 0 : i32
    %c0_i32_1 = arith.constant 0 : i32
    return %arg1, %c0_i32, %c0_i32_0 : i32, i32, i32
  }
  func.func @transform_6(%arg0: i32, %arg1: i32) -> (i32, i32, i32) {
    %c0_i32 = arith.constant 0 : i32
    %c0_i32_0 = arith.constant 0 : i32
    %c0_i32_1 = arith.constant 0 : i32
    return %arg1, %c0_i32, %c0_i32_0 : i32, i32, i32
  }
  func.func @transform_7(%arg0: i32, %arg1: i32) -> (i32, i32, i32) {
    %c0_i32 = arith.constant 0 : i32
    %c0_i32_0 = arith.constant 0 : i32
    %c0_i32_1 = arith.constant 0 : i32
    return %arg1, %c0_i32, %c0_i32_0 : i32, i32, i32
  }
  func.func @transform_8(%arg0: i32, %arg1: i32) -> (i32, i32, i32) {
    %c0_i32 = arith.constant 0 : i32
    %c0_i32_0 = arith.constant 0 : i32
    %c0_i32_1 = arith.constant 0 : i32
    return %arg1, %c0_i32, %c0_i32_0 : i32, i32, i32
  }
  func.func @transform_9(%arg0: i32, %arg1: i32) -> (i32, i32, i32) {
    %c0_i32 = arith.constant 0 : i32
    %c0_i32_0 = arith.constant 0 : i32
    %c0_i32_1 = arith.constant 0 : i32
    return %arg1, %c0_i32, %c0_i32_0 : i32, i32, i32
  }
  func.func @transform_10(%arg0: i32, %arg1: i32) -> (i32, i32, i32) {
    %c0_i32 = arith.constant 0 : i32
    %c0_i32_0 = arith.constant 0 : i32
    %c0_i32_1 = arith.constant 0 : i32
    return %arg1, %c0_i32, %c0_i32_0 : i32, i32, i32
  }
  func.func @transform_11(%arg0: i32, %arg1: i32) -> (i32, i32, i32) {
    %c0_i32 = arith.constant 0 : i32
    %c0_i32_0 = arith.constant 0 : i32
    %c0_i32_1 = arith.constant 0 : i32
    return %arg1, %c0_i32, %c0_i32_0 : i32, i32, i32
  }
  func.func @transform_12(%arg0: i32, %arg1: i32) -> (i32, i32, i32) {
    %c0_i32 = arith.constant 0 : i32
    %c0_i32_0 = arith.constant 0 : i32
    %c0_i32_1 = arith.constant 0 : i32
    return %arg1, %c0_i32, %c0_i32_0 : i32, i32, i32
  }
  func.func @transform_13(%arg0: i32, %arg1: i32) -> (i32, i32, i32) {
    %c0_i32 = arith.constant 0 : i32
    %c0_i32_0 = arith.constant 0 : i32
    %c0_i32_1 = arith.constant 0 : i32
    return %arg1, %c0_i32, %c0_i32_0 : i32, i32, i32
  }
  func.func @transform_14(%arg0: i32, %arg1: i32) -> (i32, i32, i32) {
    %c0_i32 = arith.constant 0 : i32
    %c0_i32_0 = arith.constant 0 : i32
    %c0_i32_1 = arith.constant 0 : i32
    return %arg0, %c0_i32, %c0_i32_0 : i32, i32, i32
  }
}

</mosaic_0001>

<llo_original>
// kernel: tpu_custom_call.1
$region0: #{tpu_custom_call.1}
  #allocation0 [shape = 'u32[]', space=smem, size = 0x4, offset = 0x4, fixed_abs, tag = 'smem constant byte address 0x4 - core index']
  #allocation1 [shape = 'u32[144,128]{1,0:T(1,128)}', space=vmem, size = 0x12000, scoped, tag = 'internal scratch']
  #allocation2 [shape = 'f32[8,32]{1,0:T(8,128)}', space=vmem, size = 0x1000, scoped, tag = 'scratch operand']
  %s0 = inlined_call_operand.hbm [shape: f32[2,1,8], index: 0, kind: input, shape index: {}]
  %s1 = inlined_call_operand.hbm [shape: f32[2,8,32], index: 1, kind: input, shape index: {}]
  %s2 = inlined_call_operand.vmem [shape: bf16[2,32,96], index: 2, kind: input, shape index: {}]
  %s3 = inlined_call_operand.vmem [shape: f32[2,1,96], index: 3, kind: input, shape index: {}]
  %s4 = inlined_call_operand.vmem [shape: bf16[2,32,32], index: 4, kind: input, shape index: {}]
  %s5 = inlined_call_operand.vmem [shape: f32[2,1,32], index: 5, kind: input, shape index: {}]
  %s6 = inlined_call_operand.vmem [shape: bf16[2,32,64], index: 6, kind: input, shape index: {}]
  %s7 = inlined_call_operand.vmem [shape: f32[2,1,64], index: 7, kind: input, shape index: {}]
  %s8 = inlined_call_operand.vmem [shape: bf16[2,64,32], index: 8, kind: input, shape index: {}]
  %s9 = inlined_call_operand.vmem [shape: f32[2,1,32], index: 9, kind: input, shape index: {}]
  %s10 = inlined_call_operand.vmem [shape: f32[2,1,32], index: 10, kind: input, shape index: {}]
  %s11 = inlined_call_operand.vmem [shape: f32[2,1,32], index: 11, kind: input, shape index: {}]
  %s12 = inlined_call_operand.vmem [shape: f32[2,1,32], index: 12, kind: input, shape index: {}]
  %s13 = inlined_call_operand.vmem [shape: f32[2,1,32], index: 13, kind: input, shape index: {}]
  %s14 = inlined_call_operand.hbm [shape: f32[2,8,32], index: 14, kind: output, shape index: {}]
  %s15 = sld [smem:[#allocation0]]
  $region105: #{tpu_custom_call.1} parent=0
    _
  %s17 = ssub.s32 1, %s15
  %s18 = scalar_select 0, %s17, %s15
  $region1: #{tpu_custom_call.1} parent=0
    #allocation3 [shape = 'u8[1024]{0}', space=vmem, size = 0x400, scoped, tag = 'input window, operand 0']
    #allocation4 [shape = 's32[2]{0}', space=sflag, size = 0x8, scoped, tag = 'scoped memory for tpu_custom_call.1']
    #allocation5 [shape = 's32[2]{0}', space=sflag, size = 0x8, scoped, tag = 'scoped memory for tpu_custom_call.1']
    #allocation6 [shape = 'u8[8192]{0}', space=vmem, size = 0x2000, scoped, tag = 'input window, operand 1']
    #allocation7 [shape = 's32[2]{0}', space=sflag, size = 0x8, scoped, tag = 'scoped memory for tpu_custom_call.1']
    #allocation8 [shape = 'u8[8192]{0}', space=vmem, size = 0x2000, scoped, tag = 'output window, operand 0']
    %19 = vsyncpa [#allocation4], 0
    %s20 = scalar_lea.sflag [#allocation4], 1
    %21 = vsyncpa %s20, 0
    %22 = vsyncpa [#allocation7], 0
    %s23 = scalar_lea.sflag [#allocation7], 1
    %24 = vsyncpa %s23, 0
    %25 = vsyncpa [#allocation5], 0
    %s26 = scalar_lea.sflag [#allocation5], 1
    %27 = vsyncpa %s26, 0
    loop: start=0, step=1, limit=6
    $region2: #{tpu_custom_call.1} parent=1 // loop_pre_header
      _
    $region3: #{tpu_custom_call.1} parent=1 // loop_header
      %s29 = sphi 0, %s33
      %p30 = scmp.ge.s32.totalorder %s29, 6
      %s36 = sphi 0, %s48
      %s37 = sphi 0, %s44
      %s38 = sphi 0, %s36
      %s39 = sphi 0, %s37
      %s40 = sphi 0, %s38
      %s41 = sphi 0, %s39
      %s51 = sphi 0, %s53
      %s54 = sphi 0, %s51
      %s55 = sphi 0, %s54
      %s71 = sphi 0, %s55
      %s77 = sphi 0, %s79
      %s80 = sphi 0, %s77
      %s81 = sphi 0, %s80
      %s97 = sphi 0, %s81
      %s103 = sphi 0, %s105
      %s106 = sphi 0, %s103
      %s107 = sphi 0, %s106
      %s123 = sphi 0, %s107
      %s129 = sphi 0, %s131
      %s132 = sphi 0, %s129
      %s133 = sphi 0, %s132
      %s149 = sphi 0, %s133
      %s155 = sphi 0, %s157
      %s158 = sphi 0, %s155
      %s159 = sphi 0, %s158
      %s175 = sphi 0, %s159
      %s181 = sphi 0, %s183
      %s184 = sphi 0, %s181
      %s185 = sphi 0, %s184
      %s201 = sphi 0, %s185
      %s207 = sphi 0, %s209
      %s210 = sphi 0, %s207
      %s211 = sphi 0, %s210
      %s227 = sphi 0, %s211
      %s233 = sphi 0, %s235
      %s236 = sphi 0, %s233
      %s237 = sphi 0, %s236
      %s253 = sphi 0, %s237
      %s259 = sphi 0, %s261
      %s262 = sphi 0, %s259
      %s263 = sphi 0, %s262
      %s279 = sphi 0, %s263
      %s285 = sphi 0, %s287
      %s288 = sphi 0, %s285
      %s289 = sphi 0, %s288
      %s305 = sphi 0, %s289
      %s311 = sphi 0, %s313
      %s314 = sphi 0, %s311
      %s315 = sphi 0, %s314
      %s331 = sphi 0, %s315
      %s337 = sphi 0, %s339
      %s340 = sphi 0, %s337
      %s341 = sphi 0, %s340
      %s357 = sphi 0, %s341
      %s363 = sphi 0, %s365
      %s366 = sphi 0, %s363
      %s367 = sphi 0, %s366
      %s383 = sphi 0, %s367
      %s389 = sphi 0, %s391
      %s392 = sphi 0, %s389
      %s393 = sphi 0, %s392
      %s409 = sphi 0, %s393
      %s415 = sphi 0, %s417
      %s418 = sphi 0, %s415
      %s419 = sphi 0, %s418
      %s435 = sphi 0, %s419
    $region4: #{tpu_custom_call.1} parent=1 // loop_header_branch
      %32 = sbr.rel (%p30) target = $region8
    $region5: #{tpu_custom_call.1} parent=1 // loop_body
      %s34 = ssub.s32 %s29, 1
      %s35 = ssub.s32 %s29, 2
      %s42 = sadd.s32 1, %s37
      %p43 = scmp.ge.s32.totalorder %s42, 2
      %s44 = scalar_select %p43, 0, %s42
      %s45 = sadd.s32 1, %s36
      %s46 = scalar_select %p43, %s45, %s36
      %p47 = scmp.ge.s32.totalorder %s46, 2
      %s48 = scalar_select %p47, 0, %s46
      %s49 = ssub.s32 %s36, %s48
      %p50 = scmp.eq.s32.totalorder %s49, 0
      %s52 = sadd.s32 %s51, 1
      %s53 = scalar_select %p50, %s51, %s52
      %p56 = pneg %p50
      %p57 = scmp.eq.s32.totalorder %s29, 3
      %p58 = por %p56, %p57
      %p59 = scmp.ne.s32.totalorder %s51, %s54
      %p60 = scmp.eq.s32.totalorder %s29, 0
      %p61 = por %p59, %p60
      %p62 = scmp.ne.s32.totalorder %s51, %s54
      %p63 = scmp.eq.s32.totalorder %s34, 3
      %p64 = por %p62, %p63
      %p65 = scmp.ne.s32.totalorder %s54, %s55
      %p66 = scmp.eq.s32.totalorder %s34, 0
      %p67 = por %p65, %p66
      %p68 = scmp.ne.s32.totalorder %s54, %s55
      %p69 = scmp.eq.s32.totalorder %s35, 3
      %p70 = por %p68, %p69
      %p72 = scmp.ne.s32.totalorder %s55, %s71
      %p73 = scmp.eq.s32.totalorder %s35, 0
      %p74 = por %p72, %p73
      %s75 = ssub.s32 %s36, %s48
      %p76 = scmp.eq.s32.totalorder %s75, 0
      %s78 = sadd.s32 %s77, 1
      %s79 = scalar_select %p76, %s77, %s78
      %p82 = pneg %p76
      %p83 = scmp.eq.s32.totalorder %s29, 3
      %p84 = por %p82, %p83
      %p85 = scmp.ne.s32.totalorder %s77, %s80
      %p86 = scmp.eq.s32.totalorder %s29, 0
      %p87 = por %p85, %p86
      %p88 = scmp.ne.s32.totalorder %s77, %s80
      %p89 = scmp.eq.s32.totalorder %s34, 3
      %p90 = por %p88, %p89
      %p91 = scmp.ne.s32.totalorder %s80, %s81
      %p92 = scmp.eq.s32.totalorder %s34, 0
      %p93 = por %p91, %p92
      %p94 = scmp.ne.s32.totalorder %s80, %s81
      %p95 = scmp.eq.s32.totalorder %s35, 3
      %p96 = por %p94, %p95
      %p98 = scmp.ne.s32.totalorder %s81, %s97
      %p99 = scmp.eq.s32.totalorder %s35, 0
      %p100 = por %p98, %p99
      %s101 = ssub.s32 %s37, %s44
      %p102 = scmp.eq.s32.totalorder %s101, 0
      %s104 = sadd.s32 %s103, 1
      %s105 = scalar_select %p102, %s103, %s104
      %p108 = pneg %p102
      %p109 = scmp.eq.s32.totalorder %s29, 3
      %p110 = por %p108, %p109
      %p111 = scmp.ne.s32.totalorder %s103, %s106
      %p112 = scmp.eq.s32.totalorder %s29, 0
      %p113 = por %p111, %p112
      %p114 = scmp.ne.s32.totalorder %s103, %s106
      %p115 = scmp.eq.s32.totalorder %s34, 3
      %p116 = por %p114, %p115
      %p117 = scmp.ne.s32.totalorder %s106, %s107
      %p118 = scmp.eq.s32.totalorder %s34, 0
      %p119 = por %p117, %p118
      %p120 = scmp.ne.s32.totalorder %s106, %s107
      %p121 = scmp.eq.s32.totalorder %s35, 3
      %p122 = por %p120, %p121
      %p124 = scmp.ne.s32.totalorder %s107, %s123
      %p125 = scmp.eq.s32.totalorder %s35, 0
      %p126 = por %p124, %p125
      %s127 = ssub.s32 %s37, %s44
      %p128 = scmp.eq.s32.totalorder %s127, 0
      %s130 = sadd.s32 %s129, 1
      %s131 = scalar_select %p128, %s129, %s130
      %p134 = pneg %p128
      %p135 = scmp.eq.s32.totalorder %s29, 3
      %p136 = por %p134, %p135
      %p137 = scmp.ne.s32.totalorder %s129, %s132
      %p138 = scmp.eq.s32.totalorder %s29, 0
      %p139 = por %p137, %p138
      %p140 = scmp.ne.s32.totalorder %s129, %s132
      %p141 = scmp.eq.s32.totalorder %s34, 3
      %p142 = por %p140, %p141
      %p143 = scmp.ne.s32.totalorder %s132, %s133
      %p144 = scmp.eq.s32.totalorder %s34, 0
      %p145 = por %p143, %p144
      %p146 = scmp.ne.s32.totalorder %s132, %s133
      %p147 = scmp.eq.s32.totalorder %s35, 3
      %p148 = por %p146, %p147
      %p150 = scmp.ne.s32.totalorder %s133, %s149
      %p151 = scmp.eq.s32.totalorder %s35, 0
      %p152 = por %p150, %p151
      %s153 = ssub.s32 %s37, %s44
      %p154 = scmp.eq.s32.totalorder %s153, 0
      %s156 = sadd.s32 %s155, 1
      %s157 = scalar_select %p154, %s155, %s156
      %p160 = pneg %p154
      %p161 = scmp.eq.s32.totalorder %s29, 3
      %p162 = por %p160, %p161
      %p163 = scmp.ne.s32.totalorder %s155, %s158
      %p164 = scmp.eq.s32.totalorder %s29, 0
      %p165 = por %p163, %p164
      %p166 = scmp.ne.s32.totalorder %s155, %s158
      %p167 = scmp.eq.s32.totalorder %s34, 3
      %p168 = por %p166, %p167
      %p169 = scmp.ne.s32.totalorder %s158, %s159
      %p170 = scmp.eq.s32.totalorder %s34, 0
      %p171 = por %p169, %p170
      %p172 = scmp.ne.s32.totalorder %s158, %s159
      %p173 = scmp.eq.s32.totalorder %s35, 3
      %p174 = por %p172, %p173
      %p176 = scmp.ne.s32.totalorder %s159, %s175
      %p177 = scmp.eq.s32.totalorder %s35, 0
      %p178 = por %p176, %p177
      %s179 = ssub.s32 %s37, %s44
      %p180 = scmp.eq.s32.totalorder %s179, 0
      %s182 = sadd.s32 %s181, 1
      %s183 = scalar_select %p180, %s181, %s182
      %p186 = pneg %p180
      %p187 = scmp.eq.s32.totalorder %s29, 3
      %p188 = por %p186, %p187
      %p189 = scmp.ne.s32.totalorder %s181, %s184
      %p190 = scmp.eq.s32.totalorder %s29, 0
      %p191 = por %p189, %p190
      %p192 = scmp.ne.s32.totalorder %s181, %s184
      %p193 = scmp.eq.s32.totalorder %s34, 3
      %p194 = por %p192, %p193
      %p195 = scmp.ne.s32.totalorder %s184, %s185
      %p196 = scmp.eq.s32.totalorder %s34, 0
      %p197 = por %p195, %p196
      %p198 = scmp.ne.s32.totalorder %s184, %s185
      %p199 = scmp.eq.s32.totalorder %s35, 3
      %p200 = por %p198, %p199
      %p202 = scmp.ne.s32.totalorder %s185, %s201
      %p203 = scmp.eq.s32.totalorder %s35, 0
      %p204 = por %p202, %p203
      %s205 = ssub.s32 %s37, %s44
      %p206 = scmp.eq.s32.totalorder %s205, 0
      %s208 = sadd.s32 %s207, 1
      %s209 = scalar_select %p206, %s207, %s208
      %p212 = pneg %p206
      %p213 = scmp.eq.s32.totalorder %s29, 3
      %p214 = por %p212, %p213
      %p215 = scmp.ne.s32.totalorder %s207, %s210
      %p216 = scmp.eq.s32.totalorder %s29, 0
      %p217 = por %p215, %p216
      %p218 = scmp.ne.s32.totalorder %s207, %s210
      %p219 = scmp.eq.s32.totalorder %s34, 3
      %p220 = por %p218, %p219
      %p221 = scmp.ne.s32.totalorder %s210, %s211
      %p222 = scmp.eq.s32.totalorder %s34, 0
      %p223 = por %p221, %p222
      %p224 = scmp.ne.s32.totalorder %s210, %s211
      %p225 = scmp.eq.s32.totalorder %s35, 3
      %p226 = por %p224, %p225
      %p228 = scmp.ne.s32.totalorder %s211, %s227
      %p229 = scmp.eq.s32.totalorder %s35, 0
      %p230 = por %p228, %p229
      %s231 = ssub.s32 %s37, %s44
      %p232 = scmp.eq.s32.totalorder %s231, 0
      %s234 = sadd.s32 %s233, 1
      %s235 = scalar_select %p232, %s233, %s234
      %p238 = pneg %p232
      %p239 = scmp.eq.s32.totalorder %s29, 3
      %p240 = por %p238, %p239
      %p241 = scmp.ne.s32.totalorder %s233, %s236
      %p242 = scmp.eq.s32.totalorder %s29, 0
      %p243 = por %p241, %p242
      %p244 = scmp.ne.s32.totalorder %s233, %s236
      %p245 = scmp.eq.s32.totalorder %s34, 3
      %p246 = por %p244, %p245
      %p247 = scmp.ne.s32.totalorder %s236, %s237
      %p248 = scmp.eq.s32.totalorder %s34, 0
      %p249 = por %p247, %p248
      %p250 = scmp.ne.s32.totalorder %s236, %s237
      %p251 = scmp.eq.s32.totalorder %s35, 3
      %p252 = por %p250, %p251
      %p254 = scmp.ne.s32.totalorder %s237, %s253
      %p255 = scmp.eq.s32.totalorder %s35, 0
      %p256 = por %p254, %p255
      %s257 = ssub.s32 %s37, %s44
      %p258 = scmp.eq.s32.totalorder %s257, 0
      %s260 = sadd.s32 %s259, 1
      %s261 = scalar_select %p258, %s259, %s260
      %p264 = pneg %p258
      %p265 = scmp.eq.s32.totalorder %s29, 3
      %p266 = por %p264, %p265
      %p267 = scmp.ne.s32.totalorder %s259, %s262
      %p268 = scmp.eq.s32.totalorder %s29, 0
      %p269 = por %p267, %p268
      %p270 = scmp.ne.s32.totalorder %s259, %s262
      %p271 = scmp.eq.s32.totalorder %s34, 3
      %p272 = por %p270, %p271
      %p273 = scmp.ne.s32.totalorder %s262, %s263
      %p274 = scmp.eq.s32.totalorder %s34, 0
      %p275 = por %p273, %p274
      %p276 = scmp.ne.s32.totalorder %s262, %s263
      %p277 = scmp.eq.s32.totalorder %s35, 3
      %p278 = por %p276, %p277
      %p280 = scmp.ne.s32.totalorder %s263, %s279
      %p281 = scmp.eq.s32.totalorder %s35, 0
      %p282 = por %p280, %p281
      %s283 = ssub.s32 %s37, %s44
      %p284 = scmp.eq.s32.totalorder %s283, 0
      %s286 = sadd.s32 %s285, 1
      %s287 = scalar_select %p284, %s285, %s286
      %p290 = pneg %p284
      %p291 = scmp.eq.s32.totalorder %s29, 3
      %p292 = por %p290, %p291
      %p293 = scmp.ne.s32.totalorder %s285, %s288
      %p294 = scmp.eq.s32.totalorder %s29, 0
      %p295 = por %p293, %p294
      %p296 = scmp.ne.s32.totalorder %s285, %s288
      %p297 = scmp.eq.s32.totalorder %s34, 3
      %p298 = por %p296, %p297
      %p299 = scmp.ne.s32.totalorder %s288, %s289
      %p300 = scmp.eq.s32.totalorder %s34, 0
      %p301 = por %p299, %p300
      %p302 = scmp.ne.s32.totalorder %s288, %s289
      %p303 = scmp.eq.s32.totalorder %s35, 3
      %p304 = por %p302, %p303
      %p306 = scmp.ne.s32.totalorder %s289, %s305
      %p307 = scmp.eq.s32.totalorder %s35, 0
      %p308 = por %p306, %p307
      %s309 = ssub.s32 %s37, %s44
      %p310 = scmp.eq.s32.totalorder %s309, 0
      %s312 = sadd.s32 %s311, 1
      %s313 = scalar_select %p310, %s311, %s312
      %p316 = pneg %p310
      %p317 = scmp.eq.s32.totalorder %s29, 3
      %p318 = por %p316, %p317
      %p319 = scmp.ne.s32.totalorder %s311, %s314
      %p320 = scmp.eq.s32.totalorder %s29, 0
      %p321 = por %p319, %p320
      %p322 = scmp.ne.s32.totalorder %s311, %s314
      %p323 = scmp.eq.s32.totalorder %s34, 3
      %p324 = por %p322, %p323
      %p325 = scmp.ne.s32.totalorder %s314, %s315
      %p326 = scmp.eq.s32.totalorder %s34, 0
      %p327 = por %p325, %p326
      %p328 = scmp.ne.s32.totalorder %s314, %s315
      %p329 = scmp.eq.s32.totalorder %s35, 3
      %p330 = por %p328, %p329
      %p332 = scmp.ne.s32.totalorder %s315, %s331
      %p333 = scmp.eq.s32.totalorder %s35, 0
      %p334 = por %p332, %p333
      %s335 = ssub.s32 %s37, %s44
      %p336 = scmp.eq.s32.totalorder %s335, 0
      %s338 = sadd.s32 %s337, 1
      %s339 = scalar_select %p336, %s337, %s338
      %p342 = pneg %p336
      %p343 = scmp.eq.s32.totalorder %s29, 3
      %p344 = por %p342, %p343
      %p345 = scmp.ne.s32.totalorder %s337, %s340
      %p346 = scmp.eq.s32.totalorder %s29, 0
      %p347 = por %p345, %p346
      %p348 = scmp.ne.s32.totalorder %s337, %s340
      %p349 = scmp.eq.s32.totalorder %s34, 3
      %p350 = por %p348, %p349
      %p351 = scmp.ne.s32.totalorder %s340, %s341
      %p352 = scmp.eq.s32.totalorder %s34, 0
      %p353 = por %p351, %p352
      %p354 = scmp.ne.s32.totalorder %s340, %s341
      %p355 = scmp.eq.s32.totalorder %s35, 3
      %p356 = por %p354, %p355
      %p358 = scmp.ne.s32.totalorder %s341, %s357
      %p359 = scmp.eq.s32.totalorder %s35, 0
      %p360 = por %p358, %p359
      %s361 = ssub.s32 %s37, %s44
      %p362 = scmp.eq.s32.totalorder %s361, 0
      %s364 = sadd.s32 %s363, 1
      %s365 = scalar_select %p362, %s363, %s364
      %p368 = pneg %p362
      %p369 = scmp.eq.s32.totalorder %s29, 3
      %p370 = por %p368, %p369
      %p371 = scmp.ne.s32.totalorder %s363, %s366
      %p372 = scmp.eq.s32.totalorder %s29, 0
      %p373 = por %p371, %p372
      %p374 = scmp.ne.s32.totalorder %s363, %s366
      %p375 = scmp.eq.s32.totalorder %s34, 3
      %p376 = por %p374, %p375
      %p377 = scmp.ne.s32.totalorder %s366, %s367
      %p378 = scmp.eq.s32.totalorder %s34, 0
      %p379 = por %p377, %p378
      %p380 = scmp.ne.s32.totalorder %s366, %s367
      %p381 = scmp.eq.s32.totalorder %s35, 3
      %p382 = por %p380, %p381
      %p384 = scmp.ne.s32.totalorder %s367, %s383
      %p385 = scmp.eq.s32.totalorder %s35, 0
      %p386 = por %p384, %p385
      %s387 = ssub.s32 %s37, %s44
      %p388 = scmp.eq.s32.totalorder %s387, 0
      %s390 = sadd.s32 %s389, 1
      %s391 = scalar_select %p388, %s389, %s390
      %p394 = pneg %p388
      %p395 = scmp.eq.s32.totalorder %s29, 3
      %p396 = por %p394, %p395
      %p397 = scmp.ne.s32.totalorder %s389, %s392
      %p398 = scmp.eq.s32.totalorder %s29, 0
      %p399 = por %p397, %p398
      %p400 = scmp.ne.s32.totalorder %s389, %s392
      %p401 = scmp.eq.s32.totalorder %s34, 3
      %p402 = por %p400, %p401
      %p403 = scmp.ne.s32.totalorder %s392, %s393
      %p404 = scmp.eq.s32.totalorder %s34, 0
      %p405 = por %p403, %p404
      %p406 = scmp.ne.s32.totalorder %s392, %s393
      %p407 = scmp.eq.s32.totalorder %s35, 3
      %p408 = por %p406, %p407
      %p410 = scmp.ne.s32.totalorder %s393, %s409
      %p411 = scmp.eq.s32.totalorder %s35, 0
      %p412 = por %p410, %p411
      %s413 = ssub.s32 %s36, %s48
      %p414 = scmp.eq.s32.totalorder %s413, 0
      %s416 = sadd.s32 %s415, 1
      %s417 = scalar_select %p414, %s415, %s416
      %p420 = pneg %p414
      %p421 = scmp.eq.s32.totalorder %s29, 3
      %p422 = por %p420, %p421
      %p423 = scmp.ne.s32.totalorder %s415, %s418
      %p424 = scmp.eq.s32.totalorder %s29, 0
      %p425 = por %p423, %p424
      %p426 = scmp.ne.s32.totalorder %s415, %s418
      %p427 = scmp.eq.s32.totalorder %s34, 3
      %p428 = por %p426, %p427
      %p429 = scmp.ne.s32.totalorder %s418, %s419
      %p430 = scmp.eq.s32.totalorder %s34, 0
      %p431 = por %p429, %p430
      %p432 = scmp.ne.s32.totalorder %s418, %s419
      %p433 = scmp.eq.s32.totalorder %s35, 3
      %p434 = por %p432, %p433
      %p436 = scmp.ne.s32.totalorder %s419, %s435
      %p437 = scmp.eq.s32.totalorder %s35, 0
      %p438 = por %p436, %p437
      %p439 = scmp.le.s32.totalorder 1, %s29
      %p440 = scmp.lt.s32.totalorder %s29, 5
      %p441 = pnand %p439, %p440
      %p442 = pneg %p441
      // Predicated region
      $region9: #{tpu_custom_call.1} parent=5 // pred_check
        _
      $region10: #{tpu_custom_call.1} parent=5 // pred_check_branch
        %444 = sbr.rel (%p441) target = $region12
      $region11: #{tpu_custom_call.1} parent=5 // pred_region
        %s445 = ssub.s32 %s29, 1
      $region12: #{tpu_custom_call.1} parent=5 // pred_fallthru
        _
      %p446 = scmp.lt.s32.totalorder %s29, 4
      // Predicated region
      $region13: #{tpu_custom_call.1} parent=5 // pred_check
        %p447 = pneg %p446
      $region14: #{tpu_custom_call.1} parent=5 // pred_check_branch
        %449 = sbr.rel (%p447) target = $region16
      $region15: #{tpu_custom_call.1} parent=5 // pred_region
        // Predicated region
        $region17: #{tpu_custom_call.1} parent=15 // pred_check
          %p450 = pneg %p61
        $region18: #{tpu_custom_call.1} parent=15 // pred_check_branch
          %452 = sbr.rel (%p450) target = $region20
        $region19: #{tpu_custom_call.1} parent=15 // pred_region
          %s453 = sand.u32 %s51, 1
          %s454 = scalar_lea.sflag [#allocation4], %s453
          %s455 = sand.u32 %s51, 1
          %s456 = scalar_lea.vmem [#allocation3], %s455
          %s458 = ssub.s32 16, 16
          %459 = vsyncadd %s454, %s458
          %s460 = smul.addr %s36, 16
          %s461 = scalar_lea.hbm %s0, %s460
          %s463 = sshll.u32 %s456, 4
          %s464 = int_to_ptr.vmem [resolvable:$true] %s463
          %466 = dma.hbm_to_vmem [thread:$0]  %s461, 16, %s464, %s454
        $region20: #{tpu_custom_call.1} parent=15 // pred_fallthru
          _
        // Predicated region
        $region21: #{tpu_custom_call.1} parent=15 // pred_check
          %p467 = pneg %p87
        $region22: #{tpu_custom_call.1} parent=15 // pred_check_branch
          %469 = sbr.rel (%p467) target = $region24
        $region23: #{tpu_custom_call.1} parent=15 // pred_region
          %s470 = sand.u32 %s77, 1
          %s471 = scalar_lea.sflag [#allocation7], %s470
          %s472 = sand.u32 %s77, 1
          %s473 = smul.addr %s472, 8
          %s474 = scalar_lea.vmem [#allocation6], %s473
          %s476 = ssub.s32 128, 128
          %477 = vsyncadd %s471, %s476
          %s478 = smul.addr %s36, 128
          %s479 = scalar_lea.hbm %s1, %s478
          %s481 = sshll.u32 %s474, 4
          %s482 = int_to_ptr.vmem [resolvable:$true] %s481
          %484 = dma.hbm_to_vmem [thread:$0]  %s479, 128, %s482, %s471
        $region24: #{tpu_custom_call.1} parent=15 // pred_fallthru
          _
        // Predicated region
        $region25: #{tpu_custom_call.1} parent=15 // pred_check
          %p485 = pneg %p113
        $region26: #{tpu_custom_call.1} parent=15 // pred_check_branch
          %487 = sbr.rel (%p485) target = $region28
        $region27: #{tpu_custom_call.1} parent=15 // pred_region
          %p488 = scmp.lt.s32.totalorder %s37, 1
          %s489 = scalar_select %p488, %s37, 1
          %s490 = smul.addr %s489, 4
          %s491 = smul.addr %s490, 4
          %s492 = scalar_lea.vmem %s2, %s491
        $region28: #{tpu_custom_call.1} parent=15 // pred_fallthru
          _
        // Predicated region
        $region29: #{tpu_custom_call.1} parent=15 // pred_check
          %p493 = pneg %p139
        $region30: #{tpu_custom_call.1} parent=15 // pred_check_branch
          %495 = sbr.rel (%p493) target = $region32
        $region31: #{tpu_custom_call.1} parent=15 // pred_region
          %p496 = scmp.lt.s32.totalorder %s37, 1
          %s497 = scalar_select %p496, %s37, 1
          %s498 = scalar_lea.vmem %s3, %s497
        $region32: #{tpu_custom_call.1} parent=15 // pred_fallthru
          _
        // Predicated region
        $region33: #{tpu_custom_call.1} parent=15 // pred_check
          %p499 = pneg %p165
        $region34: #{tpu_custom_call.1} parent=15 // pred_check_branch
          %501 = sbr.rel (%p499) target = $region36
        $region35: #{tpu_custom_call.1} parent=15 // pred_region
          %p502 = scmp.lt.s32.totalorder %s37, 1
          %s503 = scalar_select %p502, %s37, 1
          %s504 = smul.addr %s503, 4
          %s505 = smul.addr %s504, 4
          %s506 = scalar_lea.vmem %s4, %s505
        $region36: #{tpu_custom_call.1} parent=15 // pred_fallthru
          _
        // Predicated region
        $region37: #{tpu_custom_call.1} parent=15 // pred_check
          %p507 = pneg %p191
        $region38: #{tpu_custom_call.1} parent=15 // pred_check_branch
          %509 = sbr.rel (%p507) target = $region40
        $region39: #{tpu_custom_call.1} parent=15 // pred_region
          %p510 = scmp.lt.s32.totalorder %s37, 1
          %s511 = scalar_select %p510, %s37, 1
          %s512 = scalar_lea.vmem %s5, %s511
        $region40: #{tpu_custom_call.1} parent=15 // pred_fallthru
          _
        // Predicated region
        $region41: #{tpu_custom_call.1} parent=15 // pred_check
          %p513 = pneg %p217
        $region42: #{tpu_custom_call.1} parent=15 // pred_check_branch
          %515 = sbr.rel (%p513) target = $region44
        $region43: #{tpu_custom_call.1} parent=15 // pred_region
          %p516 = scmp.lt.s32.totalorder %s37, 1
          %s517 = scalar_select %p516, %s37, 1
          %s518 = smul.addr %s517, 4
          %s519 = smul.addr %s518, 4
          %s520 = scalar_lea.vmem %s6, %s519
        $region44: #{tpu_custom_call.1} parent=15 // pred_fallthru
          _
        // Predicated region
        $region45: #{tpu_custom_call.1} parent=15 // pred_check
          %p521 = pneg %p243
        $region46: #{tpu_custom_call.1} parent=15 // pred_check_branch
          %523 = sbr.rel (%p521) target = $region48
        $region47: #{tpu_custom_call.1} parent=15 // pred_region
          %p524 = scmp.lt.s32.totalorder %s37, 1
          %s525 = scalar_select %p524, %s37, 1
          %s526 = scalar_lea.vmem %s7, %s525
        $region48: #{tpu_custom_call.1} parent=15 // pred_fallthru
          _
        // Predicated region
        $region49: #{tpu_custom_call.1} parent=15 // pred_check
          %p527 = pneg %p269
        $region50: #{tpu_custom_call.1} parent=15 // pred_check_branch
          %529 = sbr.rel (%p527) target = $region52
        $region51: #{tpu_custom_call.1} parent=15 // pred_region
          %p530 = scmp.lt.s32.totalorder %s37, 1
          %s531 = scalar_select %p530, %s37, 1
          %s532 = smul.addr %s531, 8
          %s533 = smul.addr %s532, 4
          %s534 = scalar_lea.vmem %s8, %s533
        $region52: #{tpu_custom_call.1} parent=15 // pred_fallthru
          _
        // Predicated region
        $region53: #{tpu_custom_call.1} parent=15 // pred_check
          %p535 = pneg %p295
        $region54: #{tpu_custom_call.1} parent=15 // pred_check_branch
          %537 = sbr.rel (%p535) target = $region56
        $region55: #{tpu_custom_call.1} parent=15 // pred_region
          %p538 = scmp.lt.s32.totalorder %s37, 1
          %s539 = scalar_select %p538, %s37, 1
          %s540 = scalar_lea.vmem %s9, %s539
        $region56: #{tpu_custom_call.1} parent=15 // pred_fallthru
          _
        // Predicated region
        $region57: #{tpu_custom_call.1} parent=15 // pred_check
          %p541 = pneg %p321
        $region58: #{tpu_custom_call.1} parent=15 // pred_check_branch
          %543 = sbr.rel (%p541) target = $region60
        $region59: #{tpu_custom_call.1} parent=15 // pred_region
          %p544 = scmp.lt.s32.totalorder %s37, 1
          %s545 = scalar_select %p544, %s37, 1
          %s546 = scalar_lea.vmem %s10, %s545
        $region60: #{tpu_custom_call.1} parent=15 // pred_fallthru
          _
        // Predicated region
        $region61: #{tpu_custom_call.1} parent=15 // pred_check
          %p547 = pneg %p347
        $region62: #{tpu_custom_call.1} parent=15 // pred_check_branch
          %549 = sbr.rel (%p547) target = $region64
        $region63: #{tpu_custom_call.1} parent=15 // pred_region
          %p550 = scmp.lt.s32.totalorder %s37, 1
          %s551 = scalar_select %p550, %s37, 1
          %s552 = scalar_lea.vmem %s11, %s551
        $region64: #{tpu_custom_call.1} parent=15 // pred_fallthru
          _
        // Predicated region
        $region65: #{tpu_custom_call.1} parent=15 // pred_check
          %p553 = pneg %p373
        $region66: #{tpu_custom_call.1} parent=15 // pred_check_branch
          %555 = sbr.rel (%p553) target = $region68
        $region67: #{tpu_custom_call.1} parent=15 // pred_region
          %p556 = scmp.lt.s32.totalorder %s37, 1
          %s557 = scalar_select %p556, %s37, 1
          %s558 = scalar_lea.vmem %s12, %s557
        $region68: #{tpu_custom_call.1} parent=15 // pred_fallthru
          _
        // Predicated region
        $region69: #{tpu_custom_call.1} parent=15 // pred_check
          %p559 = pneg %p399
        $region70: #{tpu_custom_call.1} parent=15 // pred_check_branch
          %561 = sbr.rel (%p559) target = $region72
        $region71: #{tpu_custom_call.1} parent=15 // pred_region
          %p562 = scmp.lt.s32.totalorder %s37, 1
          %s563 = scalar_select %p562, %s37, 1
          %s564 = scalar_lea.vmem %s13, %s563
        $region72: #{tpu_custom_call.1} parent=15 // pred_fallthru
          _
      $region16: #{tpu_custom_call.1} parent=5 // pred_fallthru
        _
      %p565 = scmp.le.s32.totalorder 1, %s29
      %p566 = scmp.lt.s32.totalorder %s29, 5
      %p567 = pnand %p565, %p566
      %p568 = pneg %p567
      // Predicated region
      $region73: #{tpu_custom_call.1} parent=5 // pred_check
        _
      $region74: #{tpu_custom_call.1} parent=5 // pred_check_branch
        %570 = sbr.rel (%p567) target = $region76
      $region75: #{tpu_custom_call.1} parent=5 // pred_region
        %s571 = ssub.s32 %s29, 1
        %s572 = sand.u32 %s54, 1
        %s573 = scalar_lea.sflag [#allocation4], %s572
        %s574 = sand.u32 %s54, 1
        %s575 = scalar_lea.vmem [#allocation3], %s574
        // Predicated region
        $region77: #{tpu_custom_call.1} parent=75 // pred_check
          %p576 = pneg %p67
        $region78: #{tpu_custom_call.1} parent=75 // pred_check_branch
          %578 = sbr.rel (%p576) target = $region80
        $region79: #{tpu_custom_call.1} parent=75 // pred_region
          %579 = dma.done %s573, 16
        $region80: #{tpu_custom_call.1} parent=75 // pred_fallthru
          _
        %s580 = sand.u32 %s80, 1
        %s581 = scalar_lea.sflag [#allocation7], %s580
        %s582 = sand.u32 %s80, 1
        %s583 = smul.addr %s582, 8
        %s584 = scalar_lea.vmem [#allocation6], %s583
        // Predicated region
        $region81: #{tpu_custom_call.1} parent=75 // pred_check
          %p585 = pneg %p93
        $region82: #{tpu_custom_call.1} parent=75 // pred_check_branch
          %587 = sbr.rel (%p585) target = $region84
        $region83: #{tpu_custom_call.1} parent=75 // pred_region
          %588 = dma.done %s581, 128
        $region84: #{tpu_custom_call.1} parent=75 // pred_fallthru
          _
        %s589 = sand.u32 %s54, 1
        %s590 = scalar_lea.sflag [#allocation4], %s589
        %s591 = sand.u32 %s54, 1
        %s592 = scalar_lea.vmem [#allocation3], %s591
        %p593 = pneg %p67
        %p594 = pneg %p64
        %s595 = sand.u32 %s80, 1
        %s596 = scalar_lea.sflag [#allocation7], %s595
        %s597 = sand.u32 %s80, 1
        %s598 = smul.addr %s597, 8
        %s599 = scalar_lea.vmem [#allocation6], %s598
        %p600 = pneg %p93
        %p601 = pneg %p90
        %p602 = scmp.lt.s32.totalorder %s39, 1
        %s603 = scalar_select %p602, %s39, 1
        %s604 = smul.addr %s603, 4
        %s605 = smul.addr %s604, 4
        %s606 = scalar_lea.vmem %s2, %s605
        %p607 = pneg %p119
        %p608 = pneg %p116
        %p609 = scmp.lt.s32.totalorder %s39, 1
        %s610 = scalar_select %p609, %s39, 1
        %s611 = scalar_lea.vmem %s3, %s610
        %p612 = pneg %p145
        %p613 = pneg %p142
        %p614 = scmp.lt.s32.totalorder %s39, 1
        %s615 = scalar_select %p614, %s39, 1
        %s616 = smul.addr %s615, 4
        %s617 = smul.addr %s616, 4
        %s618 = scalar_lea.vmem %s4, %s617
        %p619 = pneg %p171
        %p620 = pneg %p168
        %p621 = scmp.lt.s32.totalorder %s39, 1
        %s622 = scalar_select %p621, %s39, 1
        %s623 = scalar_lea.vmem %s5, %s622
        %p624 = pneg %p197
        %p625 = pneg %p194
        %p626 = scmp.lt.s32.totalorder %s39, 1
        %s627 = scalar_select %p626, %s39, 1
        %s628 = smul.addr %s627, 4
        %s629 = smul.addr %s628, 4
        %s630 = scalar_lea.vmem %s6, %s629
        %p631 = pneg %p223
        %p632 = pneg %p220
        %p633 = scmp.lt.s32.totalorder %s39, 1
        %s634 = scalar_select %p633, %s39, 1
        %s635 = scalar_lea.vmem %s7, %s634
        %p636 = pneg %p249
        %p637 = pneg %p246
        %p638 = scmp.lt.s32.totalorder %s39, 1
        %s639 = scalar_select %p638, %s39, 1
        %s640 = smul.addr %s639, 8
        %s641 = smul.addr %s640, 4
        %s642 = scalar_lea.vmem %s8, %s641
        %p643 = pneg %p275
        %p644 = pneg %p272
        %p645 = scmp.lt.s32.totalorder %s39, 1
        %s646 = scalar_select %p645, %s39, 1
        %s647 = scalar_lea.vmem %s9, %s646
        %p648 = pneg %p301
        %p649 = pneg %p298
        %p650 = scmp.lt.s32.totalorder %s39, 1
        %s651 = scalar_select %p650, %s39, 1
        %s652 = scalar_lea.vmem %s10, %s651
        %p653 = pneg %p327
        %p654 = pneg %p324
        %p655 = scmp.lt.s32.totalorder %s39, 1
        %s656 = scalar_select %p655, %s39, 1
        %s657 = scalar_lea.vmem %s11, %s656
        %p658 = pneg %p353
        %p659 = pneg %p350
        %p660 = scmp.lt.s32.totalorder %s39, 1
        %s661 = scalar_select %p660, %s39, 1
        %s662 = scalar_lea.vmem %s12, %s661
        %p663 = pneg %p379
        %p664 = pneg %p376
        %p665 = scmp.lt.s32.totalorder %s39, 1
        %s666 = scalar_select %p665, %s39, 1
        %s667 = scalar_lea.vmem %s13, %s666
        %p668 = pneg %p405
        %p669 = pneg %p402
        %p670 = pneg %p431
        %p671 = pneg %p428
        %s672 = sand.u32 %s418, 1
        %s673 = scalar_lea.sflag [#allocation5], %s672
        %s674 = sand.u32 %s418, 1
        %s675 = smul.addr %s674, 8
        %s676 = scalar_lea.vmem [#allocation8], %s675
        %p677 = scmp.lt.s32.totalorder %s39, 1
        %s678 = scalar_select %p677, %s39, 1
        %s679 = smul.addr %s678, 4
        %s680 = smul.addr %s679, 4
        %s681 = scalar_lea.vmem %s2, %s680
        %p682 = scmp.lt.s32.totalorder %s39, 1
        %s683 = scalar_select %p682, %s39, 1
        %s684 = scalar_lea.vmem %s3, %s683
        %p685 = scmp.lt.s32.totalorder %s39, 1
        %s686 = scalar_select %p685, %s39, 1
        %s687 = smul.addr %s686, 4
        %s688 = smul.addr %s687, 4
        %s689 = scalar_lea.vmem %s4, %s688
        %p690 = scmp.lt.s32.totalorder %s39, 1
        %s691 = scalar_select %p690, %s39, 1
        %s692 = scalar_lea.vmem %s5, %s691
        %p693 = scmp.lt.s32.totalorder %s39, 1
        %s694 = scalar_select %p693, %s39, 1
        %s695 = smul.addr %s694, 4
        %s696 = smul.addr %s695, 4
        %s697 = scalar_lea.vmem %s6, %s696
        %p698 = scmp.lt.s32.totalorder %s39, 1
        %s699 = scalar_select %p698, %s39, 1
        %s700 = scalar_lea.vmem %s7, %s699
        %p701 = scmp.lt.s32.totalorder %s39, 1
        %s702 = scalar_select %p701, %s39, 1
        %s703 = smul.addr %s702, 8
        %s704 = smul.addr %s703, 4
        %s705 = scalar_lea.vmem %s8, %s704
        %p706 = scmp.lt.s32.totalorder %s39, 1
        %s707 = scalar_select %p706, %s39, 1
        %s708 = scalar_lea.vmem %s9, %s707
        %p709 = scmp.lt.s32.totalorder %s39, 1
        %s710 = scalar_select %p709, %s39, 1
        %s711 = scalar_lea.vmem %s10, %s710
        %p712 = scmp.lt.s32.totalorder %s39, 1
        %s713 = scalar_select %p712, %s39, 1
        %s714 = scalar_lea.vmem %s11, %s713
        %p715 = scmp.lt.s32.totalorder %s39, 1
        %s716 = scalar_select %p715, %s39, 1
        %s717 = scalar_lea.vmem %s12, %s716
        %p718 = scmp.lt.s32.totalorder %s39, 1
        %s719 = scalar_select %p718, %s39, 1
        %s720 = scalar_lea.vmem %s13, %s719
        %p722 = scmp.eq.s32.totalorder %s39, 0
        // Predicated region
        $region85: #{tpu_custom_call.1} parent=75 // pred_check
          %p723 = pneg %p722
        $region86: #{tpu_custom_call.1} parent=75 // pred_check_branch
          %725 = sbr.rel (%p723) target = $region88
        $region87: #{tpu_custom_call.1} parent=75 // pred_region
          %v726 = vld [vmem:[%s584] sm:$0xff]
          %vm727 = vcmask 261120
          %728 = vst.msk [vmem:[#allocation2] sm:$0xff] %vm727, %v726
        $region88: #{tpu_custom_call.1} parent=75 // pred_fallthru
          _
        %v729 = vld [vmem:[#allocation2] sm:$0xff]
        %v730 = vld [vmem:[%s575] sm:$0x1]
        %v732 = vlaneseq
        %v733 = vshrl.u32 %v732, 7
        %v734 = vsub.s32 0, %v733
        %v735 = vrot.slane %v730, %v734
        %v737 = vld [vmem:[%s711] sm:$0x1]
        %v738 = vld [vmem:[%s714] sm:$0x1]
        %vm739 = vcmask 261120
        %v740 = vsel %vm739, %v729, 0.0
        %741 = vadd.xlane.f32.xlu0 %v740
        %v742 = vpop.xlane.xlu0 %741
        %v743 = vrcp.pop 32.0
        %v744 = vmul.f32 %v742, %v743
        %v745 = vsub.f32 %v729, %v744
        %v746 = vmul.f32 %v745, %v745
        %v747 = vsel %vm739, %v746, 0.0
        %748 = vadd.xlane.f32.xlu0 %v747
        %v749 = vpop.xlane.xlu0 %748
        %v750 = vmul.f32 %v749, %v743
        %v751 = vadd.f32 %v750, 1e-05
        %v752 = vrsqrt.pop %v751
        %v753 = vmul.f32 %v745, %v752
        %v755 = vlaneseq
        %v756 = vshrl.u32 %v755, 7
        %v757 = vsub.s32 0, %v756
        %v758 = vrot.slane %v737, %v757
        %v760 = vmul.f32 %v753, %v758
        %v762 = vlaneseq
        %v763 = vshrl.u32 %v762, 7
        %v764 = vsub.s32 0, %v763
        %v765 = vrot.slane %v738, %v764
        %v767 = vadd.f32 %v760, %v765
        %v768 = vpack.c.bf16 %v767, %v767
        %v769 = vld [vmem:[%s681] sm:$0xf]
        %v770 = vld [vmem:[%s681 + $0x4] sm:$0xf]
        %v771 = vld [vmem:[%s681 + $0x8] sm:$0xf]
        %v772 = vld [vmem:[%s681 + $0xc] sm:$0xf]
        %v773 = vld [vmem:[%s684] sm:$0x1]
        %v775 = vlaneseq
        %v776 = vshrl.u32 %v775, 7
        %v777 = vsub.s32 0, %v776
        %v778 = vrot.slane %v773, %v777
        %v784 = vunpack.c.l.b16 %v769
        %v785 = vunpack.c.l.b16 %v770
        %v786 = vunpack.c.l.b16 %v771
        %v787 = vunpack.c.l.b16 %v772
        %v788 = vpack.c.b16 %v785, %v784
        %v789 = vpack.c.b16 %v787, %v786
        %v793 = vsel %vm739, %v768, 0
        %795 = vmatprep.subr.bf16.mxu0 0
        %796 = vmatpush1.bf16.msra.mxu0 0
        %797 = vmatprep.subr.bf16.mxu0 0
        %798 = vmatpush1.bf16.msra.mxu0 0
        %799 = vmatprep.subr.bf16.mxu0 0
        %800 = vmatpush1.bf16.msra.mxu0 0
        %801 = vmatprep.subr.bf16.mxu0 0
        %802 = vmatpush1.bf16.msra.mxu0 0
        %803 = vmatprep.subr.bf16.mxu0 0
        %804 = vmatpush1.bf16.msra.mxu0 0
        %805 = vmatprep.subr.bf16.mxu0 0
        %806 = vmatpush1.bf16.msra.mxu0 0
        %807 = vmatprep.subr.bf16.mxu0 0
        %808 = vmatpush1.bf16.msra.mxu0 %v789
        %809 = vmatprep.subr.bf16.mxu0 0
        %810 = vmatpush1.bf16.msra.mxu0 %v788
        %811 = vmatprep.subr.bf16.mxu0 0
        %812 = vmatpush2.bf16.msra.mxu0 0
        %813 = vmatprep.subr.bf16.mxu0 0
        %814 = vmatpush2.bf16.msra.mxu0 0
        %815 = vmatprep.subr.bf16.mxu0 0
        %816 = vmatpush2.bf16.msra.mxu0 0
        %817 = vmatprep.subr.bf16.mxu0 0
        %818 = vmatpush2.bf16.msra.mxu0 0
        %819 = vmatprep.subr.bf16.mxu0 0
        %820 = vmatpush2.bf16.msra.mxu0 0
        %821 = vmatprep.subr.bf16.mxu0 0
        %822 = vmatpush2.bf16.msra.mxu0 0
        %823 = vmatprep.subr.bf16.mxu0 0
        %824 = vmatpush2.bf16.msra.mxu0 0
        %825 = vmatprep.subr.bf16.mxu0 0
        %826 = vmatpush2.bf16.msra.mxu0 0
        %827 = vmatprep.mubr.bf16.mxu0 0
        %828 = vmatmul.mubr.bf16.gmra.mxu0 %v793
        %v829 = vpop.f32.mrf.mxu0
        %v830 = vadd.f32 %v778, %v829
        %v831 = vpop.f32.mrf.mxu0
        %v832 = vpop.f32.mrf.mxu0
        %v833 = vpop.f32.mrf.mxu0
        %834 = vdwg.mxu0
        %v835 = vpack.c.bf16 %v830, %v830
        %837 = vrot.lane.b32.xlu0 %v835, 96
        %v838 = vpop.permute.xlu0 %837
        %vm839 = vcmask 64512
        %v841 = vsel %vm839, %v835, 0
        %v844 = vsel %vm839, %v838, 0
        %846 = vmatprep.subr.bf16.mxu0 0
        %847 = vmatpush1.bf16.xpose.msra.mxu0 0
        %848 = vmatprep.subr.bf16.mxu0 0
        %849 = vmatpush1.bf16.xpose.msra.mxu0 0
        %850 = vmatprep.subr.bf16.mxu0 0
        %851 = vmatpush1.bf16.xpose.msra.mxu0 0
        %852 = vmatprep.subr.bf16.mxu0 0
        %853 = vmatpush1.bf16.xpose.msra.mxu0 0
        %854 = vmatprep.subr.bf16.mxu0 0
        %855 = vmatpush1.bf16.xpose.msra.mxu0 0
        %856 = vmatprep.subr.bf16.mxu0 0
        %857 = vmatpush1.bf16.xpose.msra.mxu0 0
        %858 = vmatprep.subr.bf16.mxu0 0
        %859 = vmatpush1.bf16.xpose.msra.mxu0 0
        %860 = vmatprep.subr.bf16.mxu0 0
        %861 = vmatpush1.bf16.xpose.msra.mxu0 %v844
        %862 = vmatprep.subr.bf16.mxu0 0
        %863 = vmatpush2.bf16.xpose.msra.mxu0 0
        %864 = vmatprep.subr.bf16.mxu0 0
        %865 = vmatpush2.bf16.xpose.msra.mxu0 0
        %866 = vmatprep.subr.bf16.mxu0 0
        %867 = vmatpush2.bf16.xpose.msra.mxu0 0
        %868 = vmatprep.subr.bf16.mxu0 0
        %869 = vmatpush2.bf16.xpose.msra.mxu0 0
        %870 = vmatprep.subr.bf16.mxu0 0
        %871 = vmatpush2.bf16.xpose.msra.mxu0 0
        %872 = vmatprep.subr.bf16.mxu0 0
        %873 = vmatpush2.bf16.xpose.msra.mxu0 0
        %874 = vmatprep.subr.bf16.mxu0 0
        %875 = vmatpush2.bf16.xpose.msra.mxu0 0
        %876 = vmatprep.subr.bf16.mxu0 0
        %877 = vmatpush2.bf16.xpose.msra.mxu0 0
        %878 = vmatprep.mubr.bf16.mxu0 0
        %879 = vmatmul.mubr.bf16.gmra.mxu0 %v841
        %v880 = vpop.f32.mrf.mxu0
        %v881 = vadd.f32 %v735, %v880
        %v882 = vpop.f32.mrf.mxu0
        %v883 = vpop.f32.mrf.mxu0
        %v884 = vpop.f32.mrf.mxu0
        %885 = vdwg.mxu0
        %v886 = vsel %vm839, %v881, -inf
        %887 = vmax.xlane.f32.xlu0 %v886
        %v888 = vpop.xlane.xlu0 %887
        %v889 = vsub.f32 %v881, %v888
        %v890 = vmul.f32 %v889, 1.442695
        %v891 = vpow.pop %v890
        %v892 = vsel %vm839, %v891, 0.0
        %893 = vadd.xlane.f32.xlu0 %v892
        %v894 = vpop.xlane.xlu0 %893
        %v895 = vrcp.pop %v894
        %v896 = vmul.f32 %v891, %v895
        %v897 = vpack.c.bf16 %v896, %v896
        %898 = vrot.lane.b32.xlu0 %v835, 64
        %v899 = vpop.permute.xlu0 %898
        %v901 = vsel %vm839, %v897, 0
        %vm903 = vcmask 1043456
        %v905 = vsel %vm903, %v899, 0
        %907 = vmatprep.subr.bf16.mxu0 0
        %908 = vmatpush1.bf16.msra.mxu0 0
        %909 = vmatprep.subr.bf16.mxu0 0
        %910 = vmatpush1.bf16.msra.mxu0 0
        %911 = vmatprep.subr.bf16.mxu0 0
        %912 = vmatpush1.bf16.msra.mxu0 0
        %913 = vmatprep.subr.bf16.mxu0 0
        %914 = vmatpush1.bf16.msra.mxu0 0
        %915 = vmatprep.subr.bf16.mxu0 0
        %916 = vmatpush1.bf16.msra.mxu0 0
        %917 = vmatprep.subr.bf16.mxu0 0
        %918 = vmatpush1.bf16.msra.mxu0 0
        %919 = vmatprep.subr.bf16.mxu0 0
        %920 = vmatpush1.bf16.msra.mxu0 0
        %921 = vmatprep.subr.bf16.mxu0 0
        %922 = vmatpush1.bf16.msra.mxu0 %v905
        %923 = vmatprep.subr.bf16.mxu0 0
        %924 = vmatpush2.bf16.msra.mxu0 0
        %925 = vmatprep.subr.bf16.mxu0 0
        %926 = vmatpush2.bf16.msra.mxu0 0
        %927 = vmatprep.subr.bf16.mxu0 0
        %928 = vmatpush2.bf16.msra.mxu0 0
        %929 = vmatprep.subr.bf16.mxu0 0
        %930 = vmatpush2.bf16.msra.mxu0 0
        %931 = vmatprep.subr.bf16.mxu0 0
        %932 = vmatpush2.bf16.msra.mxu0 0
        %933 = vmatprep.subr.bf16.mxu0 0
        %934 = vmatpush2.bf16.msra.mxu0 0
        %935 = vmatprep.subr.bf16.mxu0 0
        %936 = vmatpush2.bf16.msra.mxu0 0
        %937 = vmatprep.subr.bf16.mxu0 0
        %938 = vmatpush2.bf16.msra.mxu0 0
        %939 = vmatprep.mubr.bf16.mxu0 0
        %940 = vmatmul.mubr.bf16.gmra.mxu0 %v901
        %v941 = vpop.f32.mrf.mxu0
        %v942 = vadd.f32 0.0, %v941
        %v943 = vpop.f32.mrf.mxu0
        %v944 = vpop.f32.mrf.mxu0
        %v945 = vpop.f32.mrf.mxu0
        %946 = vdwg.mxu0
        %947 = vrot.lane.b32.xlu0 %v835, 120
        %v948 = vpop.permute.xlu0 %947
        %949 = vrot.lane.b32.xlu0 %v835, 88
        %v950 = vpop.permute.xlu0 %949
        %v952 = vsel %vm839, %v948, 0
        %v955 = vsel %vm839, %v950, 0
        %957 = vmatprep.subr.bf16.mxu0 0
        %958 = vmatpush1.bf16.xpose.msra.mxu0 0
        %959 = vmatprep.subr.bf16.mxu0 0
        %960 = vmatpush1.bf16.xpose.msra.mxu0 0
        %961 = vmatprep.subr.bf16.mxu0 0
        %962 = vmatpush1.bf16.xpose.msra.mxu0 0
        %963 = vmatprep.subr.bf16.mxu0 0
        %964 = vmatpush1.bf16.xpose.msra.mxu0 0
        %965 = vmatprep.subr.bf16.mxu0 0
        %966 = vmatpush1.bf16.xpose.msra.mxu0 0
        %967 = vmatprep.subr.bf16.mxu0 0
        %968 = vmatpush1.bf16.xpose.msra.mxu0 0
        %969 = vmatprep.subr.bf16.mxu0 0
        %970 = vmatpush1.bf16.xpose.msra.mxu0 0
        %971 = vmatprep.subr.bf16.mxu0 0
        %972 = vmatpush1.bf16.xpose.msra.mxu0 %v955
        %973 = vmatprep.subr.bf16.mxu0 0
        %974 = vmatpush2.bf16.xpose.msra.mxu0 0
        %975 = vmatprep.subr.bf16.mxu0 0
        %976 = vmatpush2.bf16.xpose.msra.mxu0 0
        %977 = vmatprep.subr.bf16.mxu0 0
        %978 = vmatpush2.bf16.xpose.msra.mxu0 0
        %979 = vmatprep.subr.bf16.mxu0 0
        %980 = vmatpush2.bf16.xpose.msra.mxu0 0
        %981 = vmatprep.subr.bf16.mxu0 0
        %982 = vmatpush2.bf16.xpose.msra.mxu0 0
        %983 = vmatprep.subr.bf16.mxu0 0
        %984 = vmatpush2.bf16.xpose.msra.mxu0 0
        %985 = vmatprep.subr.bf16.mxu0 0
        %986 = vmatpush2.bf16.xpose.msra.mxu0 0
        %987 = vmatprep.subr.bf16.mxu0 0
        %988 = vmatpush2.bf16.xpose.msra.mxu0 0
        %989 = vmatprep.mubr.bf16.mxu0 0
        %990 = vmatmul.mubr.bf16.gmra.mxu0 %v952
        %v991 = vpop.f32.mrf.mxu0
        %v992 = vadd.f32 %v735, %v991
        %v993 = vpop.f32.mrf.mxu0
        %v994 = vpop.f32.mrf.mxu0
        %v995 = vpop.f32.mrf.mxu0
        %996 = vdwg.mxu0
        %v997 = vsel %vm839, %v992, -inf
        %998 = vmax.xlane.f32.xlu0 %v997
        %v999 = vpop.xlane.xlu0 %998
        %v1000 = vsub.f32 %v992, %v999
        %v1001 = vmul.f32 %v1000, 1.442695
        %v1002 = vpow.pop %v1001
        %v1003 = vsel %vm839, %v1002, 0.0
        %1004 = vadd.xlane.f32.xlu0 %v1003
        %v1005 = vpop.xlane.xlu0 %1004
        %v1006 = vrcp.pop %v1005
        %v1007 = vmul.f32 %v1002, %v1006
        %v1008 = vpack.c.bf16 %v1007, %v1007
        %1009 = vrot.lane.b32.xlu0 %v835, 56
        %v1010 = vpop.permute.xlu0 %1009
        %v1012 = vsel %vm839, %v1008, 0
        %v1015 = vsel %vm903, %v1010, 0
        %1017 = vmatprep.subr.bf16.mxu0 0
        %1018 = vmatpush1.bf16.msra.mxu0 0
        %1019 = vmatprep.subr.bf16.mxu0 0
        %1020 = vmatpush1.bf16.msra.mxu0 0
        %1021 = vmatprep.subr.bf16.mxu0 0
        %1022 = vmatpush1.bf16.msra.mxu0 0
        %1023 = vmatprep.subr.bf16.mxu0 0
        %1024 = vmatpush1.bf16.msra.mxu0 0
        %1025 = vmatprep.subr.bf16.mxu0 0
        %1026 = vmatpush1.bf16.msra.mxu0 0
        %1027 = vmatprep.subr.bf16.mxu0 0
        %1028 = vmatpush1.bf16.msra.mxu0 0
        %1029 = vmatprep.subr.bf16.mxu0 0
        %1030 = vmatpush1.bf16.msra.mxu0 0
        %1031 = vmatprep.subr.bf16.mxu0 0
        %1032 = vmatpush1.bf16.msra.mxu0 %v1015
        %1033 = vmatprep.subr.bf16.mxu0 0
        %1034 = vmatpush2.bf16.msra.mxu0 0
        %1035 = vmatprep.subr.bf16.mxu0 0
        %1036 = vmatpush2.bf16.msra.mxu0 0
        %1037 = vmatprep.subr.bf16.mxu0 0
        %1038 = vmatpush2.bf16.msra.mxu0 0
        %1039 = vmatprep.subr.bf16.mxu0 0
        %1040 = vmatpush2.bf16.msra.mxu0 0
        %1041 = vmatprep.subr.bf16.mxu0 0
        %1042 = vmatpush2.bf16.msra.mxu0 0
        %1043 = vmatprep.subr.bf16.mxu0 0
        %1044 = vmatpush2.bf16.msra.mxu0 0
        %1045 = vmatprep.subr.bf16.mxu0 0
        %1046 = vmatpush2.bf16.msra.mxu0 0
        %1047 = vmatprep.subr.bf16.mxu0 0
        %1048 = vmatpush2.bf16.msra.mxu0 0
        %1049 = vmatprep.mubr.bf16.mxu0 0
        %1050 = vmatmul.mubr.bf16.gmra.mxu0 %v1012
        %v1051 = vpop.f32.mrf.mxu0
        %v1052 = vadd.f32 0.0, %v1051
        %v1053 = vpop.f32.mrf.mxu0
        %v1054 = vpop.f32.mrf.mxu0
        %v1055 = vpop.f32.mrf.mxu0
        %1056 = vdwg.mxu0
        %1057 = vrot.lane.b32.xlu0 %v835, 112
        %v1058 = vpop.permute.xlu0 %1057
        %1059 = vrot.lane.b32.xlu0 %v835, 80
        %v1060 = vpop.permute.xlu0 %1059
        %v1062 = vsel %vm839, %v1058, 0
        %v1065 = vsel %vm839, %v1060, 0
        %1067 = vmatprep.subr.bf16.mxu0 0
        %1068 = vmatpush1.bf16.xpose.msra.mxu0 0
        %1069 = vmatprep.subr.bf16.mxu0 0
        %1070 = vmatpush1.bf16.xpose.msra.mxu0 0
        %1071 = vmatprep.subr.bf16.mxu0 0
        %1072 = vmatpush1.bf16.xpose.msra.mxu0 0
        %1073 = vmatprep.subr.bf16.mxu0 0
        %1074 = vmatpush1.bf16.xpose.msra.mxu0 0
        %1075 = vmatprep.subr.bf16.mxu0 0
        %1076 = vmatpush1.bf16.xpose.msra.mxu0 0
        %1077 = vmatprep.subr.bf16.mxu0 0
        %1078 = vmatpush1.bf16.xpose.msra.mxu0 0
        %1079 = vmatprep.subr.bf16.mxu0 0
        %1080 = vmatpush1.bf16.xpose.msra.mxu0 0
        %1081 = vmatprep.subr.bf16.mxu0 0
        %1082 = vmatpush1.bf16.xpose.msra.mxu0 %v1065
        %1083 = vmatprep.subr.bf16.mxu0 0
        %1084 = vmatpush2.bf16.xpose.msra.mxu0 0
        %1085 = vmatprep.subr.bf16.mxu0 0
        %1086 = vmatpush2.bf16.xpose.msra.mxu0 0
        %1087 = vmatprep.subr.bf16.mxu0 0
        %1088 = vmatpush2.bf16.xpose.msra.mxu0 0
        %1089 = vmatprep.subr.bf16.mxu0 0
        %1090 = vmatpush2.bf16.xpose.msra.mxu0 0
        %1091 = vmatprep.subr.bf16.mxu0 0
        %1092 = vmatpush2.bf16.xpose.msra.mxu0 0
        %1093 = vmatprep.subr.bf16.mxu0 0
        %1094 = vmatpush2.bf16.xpose.msra.mxu0 0
        %1095 = vmatprep.subr.bf16.mxu0 0
        %1096 = vmatpush2.bf16.xpose.msra.mxu0 0
        %1097 = vmatprep.subr.bf16.mxu0 0
        %1098 = vmatpush2.bf16.xpose.msra.mxu0 0
        %1099 = vmatprep.mubr.bf16.mxu0 0
        %1100 = vmatmul.mubr.bf16.gmra.mxu0 %v1062
        %v1101 = vpop.f32.mrf.mxu0
        %v1102 = vadd.f32 %v735, %v1101
        %v1103 = vpop.f32.mrf.mxu0
        %v1104 = vpop.f32.mrf.mxu0
        %v1105 = vpop.f32.mrf.mxu0
        %1106 = vdwg.mxu0
        %v1107 = vsel %vm839, %v1102, -inf
        %1108 = vmax.xlane.f32.xlu0 %v1107
        %v1109 = vpop.xlane.xlu0 %1108
        %v1110 = vsub.f32 %v1102, %v1109
        %v1111 = vmul.f32 %v1110, 1.442695
        %v1112 = vpow.pop %v1111
        %v1113 = vsel %vm839, %v1112, 0.0
        %1114 = vadd.xlane.f32.xlu0 %v1113
        %v1115 = vpop.xlane.xlu0 %1114
        %v1116 = vrcp.pop %v1115
        %v1117 = vmul.f32 %v1112, %v1116
        %v1118 = vpack.c.bf16 %v1117, %v1117
        %1119 = vrot.lane.b32.xlu0 %v835, 48
        %v1120 = vpop.permute.xlu0 %1119
        %v1122 = vsel %vm839, %v1118, 0
        %v1125 = vsel %vm903, %v1120, 0
        %1127 = vmatprep.subr.bf16.mxu0 0
        %1128 = vmatpush1.bf16.msra.mxu0 0
        %1129 = vmatprep.subr.bf16.mxu0 0
        %1130 = vmatpush1.bf16.msra.mxu0 0
        %1131 = vmatprep.subr.bf16.mxu0 0
        %1132 = vmatpush1.bf16.msra.mxu0 0
        %1133 = vmatprep.subr.bf16.mxu0 0
        %1134 = vmatpush1.bf16.msra.mxu0 0
        %1135 = vmatprep.subr.bf16.mxu0 0
        %1136 = vmatpush1.bf16.msra.mxu0 0
        %1137 = vmatprep.subr.bf16.mxu0 0
        %1138 = vmatpush1.bf16.msra.mxu0 0
        %1139 = vmatprep.subr.bf16.mxu0 0
        %1140 = vmatpush1.bf16.msra.mxu0 0
        %1141 = vmatprep.subr.bf16.mxu0 0
        %1142 = vmatpush1.bf16.msra.mxu0 %v1125
        %1143 = vmatprep.subr.bf16.mxu0 0
        %1144 = vmatpush2.bf16.msra.mxu0 0
        %1145 = vmatprep.subr.bf16.mxu0 0
        %1146 = vmatpush2.bf16.msra.mxu0 0
        %1147 = vmatprep.subr.bf16.mxu0 0
        %1148 = vmatpush2.bf16.msra.mxu0 0
        %1149 = vmatprep.subr.bf16.mxu0 0
        %1150 = vmatpush2.bf16.msra.mxu0 0
        %1151 = vmatprep.subr.bf16.mxu0 0
        %1152 = vmatpush2.bf16.msra.mxu0 0
        %1153 = vmatprep.subr.bf16.mxu0 0
        %1154 = vmatpush2.bf16.msra.mxu0 0
        %1155 = vmatprep.subr.bf16.mxu0 0
        %1156 = vmatpush2.bf16.msra.mxu0 0
        %1157 = vmatprep.subr.bf16.mxu0 0
        %1158 = vmatpush2.bf16.msra.mxu0 0
        %1159 = vmatprep.mubr.bf16.mxu0 0
        %1160 = vmatmul.mubr.bf16.gmra.mxu0 %v1122
        %v1161 = vpop.f32.mrf.mxu0
        %v1162 = vadd.f32 0.0, %v1161
        %v1163 = vpop.f32.mrf.mxu0
        %v1164 = vpop.f32.mrf.mxu0
        %v1165 = vpop.f32.mrf.mxu0
        %1166 = vdwg.mxu0
        %1167 = vrot.lane.b32.xlu0 %v835, 104
        %v1168 = vpop.permute.xlu0 %1167
        %1169 = vrot.lane.b32.xlu0 %v835, 72
        %v1170 = vpop.permute.xlu0 %1169
        %v1172 = vsel %vm839, %v1168, 0
        %v1175 = vsel %vm839, %v1170, 0
        %1177 = vmatprep.subr.bf16.mxu0 0
        %1178 = vmatpush1.bf16.xpose.msra.mxu0 0
        %1179 = vmatprep.subr.bf16.mxu0 0
        %1180 = vmatpush1.bf16.xpose.msra.mxu0 0
        %1181 = vmatprep.subr.bf16.mxu0 0
        %1182 = vmatpush1.bf16.xpose.msra.mxu0 0
        %1183 = vmatprep.subr.bf16.mxu0 0
        %1184 = vmatpush1.bf16.xpose.msra.mxu0 0
        %1185 = vmatprep.subr.bf16.mxu0 0
        %1186 = vmatpush1.bf16.xpose.msra.mxu0 0
        %1187 = vmatprep.subr.bf16.mxu0 0
        %1188 = vmatpush1.bf16.xpose.msra.mxu0 0
        %1189 = vmatprep.subr.bf16.mxu0 0
        %1190 = vmatpush1.bf16.xpose.msra.mxu0 0
        %1191 = vmatprep.subr.bf16.mxu0 0
        %1192 = vmatpush1.bf16.xpose.msra.mxu0 %v1175
        %1193 = vmatprep.subr.bf16.mxu0 0
        %1194 = vmatpush2.bf16.xpose.msra.mxu0 0
        %1195 = vmatprep.subr.bf16.mxu0 0
        %1196 = vmatpush2.bf16.xpose.msra.mxu0 0
        %1197 = vmatprep.subr.bf16.mxu0 0
        %1198 = vmatpush2.bf16.xpose.msra.mxu0 0
        %1199 = vmatprep.subr.bf16.mxu0 0
        %1200 = vmatpush2.bf16.xpose.msra.mxu0 0
        %1201 = vmatprep.subr.bf16.mxu0 0
        %1202 = vmatpush2.bf16.xpose.msra.mxu0 0
        %1203 = vmatprep.subr.bf16.mxu0 0
        %1204 = vmatpush2.bf16.xpose.msra.mxu0 0
        %1205 = vmatprep.subr.bf16.mxu0 0
        %1206 = vmatpush2.bf16.xpose.msra.mxu0 0
        %1207 = vmatprep.subr.bf16.mxu0 0
        %1208 = vmatpush2.bf16.xpose.msra.mxu0 0
        %1209 = vmatprep.mubr.bf16.mxu0 0
        %1210 = vmatmul.mubr.bf16.gmra.mxu0 %v1172
        %v1211 = vpop.f32.mrf.mxu0
        %v1212 = vadd.f32 %v735, %v1211
        %v1213 = vpop.f32.mrf.mxu0
        %v1214 = vpop.f32.mrf.mxu0
        %v1215 = vpop.f32.mrf.mxu0
        %1216 = vdwg.mxu0
        %v1217 = vsel %vm839, %v1212, -inf
        %1218 = vmax.xlane.f32.xlu0 %v1217
        %v1219 = vpop.xlane.xlu0 %1218
        %v1220 = vsub.f32 %v1212, %v1219
        %v1221 = vmul.f32 %v1220, 1.442695
        %v1222 = vpow.pop %v1221
        %v1223 = vsel %vm839, %v1222, 0.0
        %1224 = vadd.xlane.f32.xlu0 %v1223
        %v1225 = vpop.xlane.xlu0 %1224
        %v1226 = vrcp.pop %v1225
        %v1227 = vmul.f32 %v1222, %v1226
        %v1228 = vpack.c.bf16 %v1227, %v1227
        %1229 = vrot.lane.b32.xlu0 %v835, 40
        %v1230 = vpop.permute.xlu0 %1229
        %v1232 = vsel %vm839, %v1228, 0
        %v1235 = vsel %vm903, %v1230, 0
        %1237 = vmatprep.subr.bf16.mxu0 0
        %1238 = vmatpush1.bf16.msra.mxu0 0
        %1239 = vmatprep.subr.bf16.mxu0 0
        %1240 = vmatpush1.bf16.msra.mxu0 0
        %1241 = vmatprep.subr.bf16.mxu0 0
        %1242 = vmatpush1.bf16.msra.mxu0 0
        %1243 = vmatprep.subr.bf16.mxu0 0
        %1244 = vmatpush1.bf16.msra.mxu0 0
        %1245 = vmatprep.subr.bf16.mxu0 0
        %1246 = vmatpush1.bf16.msra.mxu0 0
        %1247 = vmatprep.subr.bf16.mxu0 0
        %1248 = vmatpush1.bf16.msra.mxu0 0
        %1249 = vmatprep.subr.bf16.mxu0 0
        %1250 = vmatpush1.bf16.msra.mxu0 0
        %1251 = vmatprep.subr.bf16.mxu0 0
        %1252 = vmatpush1.bf16.msra.mxu0 %v1235
        %1253 = vmatprep.subr.bf16.mxu0 0
        %1254 = vmatpush2.bf16.msra.mxu0 0
        %1255 = vmatprep.subr.bf16.mxu0 0
        %1256 = vmatpush2.bf16.msra.mxu0 0
        %1257 = vmatprep.subr.bf16.mxu0 0
        %1258 = vmatpush2.bf16.msra.mxu0 0
        %1259 = vmatprep.subr.bf16.mxu0 0
        %1260 = vmatpush2.bf16.msra.mxu0 0
        %1261 = vmatprep.subr.bf16.mxu0 0
        %1262 = vmatpush2.bf16.msra.mxu0 0
        %1263 = vmatprep.subr.bf16.mxu0 0
        %1264 = vmatpush2.bf16.msra.mxu0 0
        %1265 = vmatprep.subr.bf16.mxu0 0
        %1266 = vmatpush2.bf16.msra.mxu0 0
        %1267 = vmatprep.subr.bf16.mxu0 0
        %1268 = vmatpush2.bf16.msra.mxu0 0
        %1269 = vmatprep.mubr.bf16.mxu0 0
        %1270 = vmatmul.mubr.bf16.gmra.mxu0 %v1232
        %v1271 = vpop.f32.mrf.mxu0
        %v1272 = vadd.f32 0.0, %v1271
        %v1273 = vpop.f32.mrf.mxu0
        %v1274 = vpop.f32.mrf.mxu0
        %v1275 = vpop.f32.mrf.mxu0
        %1276 = vdwg.mxu0
        %1278 = vrot.lane.b32.xlu0 %v1052, 8
        %v1279 = vpop.permute.xlu0 %1278
        %1282 = vrot.lane.b32.xlu0 %v1162, 16
        %v1283 = vpop.permute.xlu0 %1282
        %1286 = vrot.lane.b32.xlu0 %v1272, 24
        %v1287 = vpop.permute.xlu0 %1286
        %v1289 = vsel %vm839, %v942, %v1279
        %vm1290 = vcmask 130048
        %v1291 = vsel %vm1290, %v1289, %v1283
        %vm1292 = vcmask 195584
        %v1293 = vsel %vm1292, %v1291, %v1287
        %v1294 = vpack.c.bf16 %v1293, %v1293
        %v1295 = vld [vmem:[%s689] sm:$0xf]
        %v1296 = vld [vmem:[%s689 + $0x4] sm:$0xf]
        %v1297 = vld [vmem:[%s689 + $0x8] sm:$0xf]
        %v1298 = vld [vmem:[%s689 + $0xc] sm:$0xf]
        %v1299 = vld [vmem:[%s692] sm:$0x1]
        %v1301 = vlaneseq
        %v1302 = vshrl.u32 %v1301, 7
        %v1303 = vsub.s32 0, %v1302
        %v1304 = vrot.slane %v1299, %v1303
        %v1310 = vunpack.c.l.b16 %v1295
        %v1311 = vunpack.c.l.b16 %v1296
        %v1312 = vunpack.c.l.b16 %v1297
        %v1313 = vunpack.c.l.b16 %v1298
        %v1314 = vpack.c.b16 %v1311, %v1310
        %v1315 = vpack.c.b16 %v1313, %v1312
        %v1319 = vsel %vm739, %v1294, 0
        %1321 = vmatprep.subr.bf16.mxu0 0
        %1322 = vmatpush1.bf16.msra.mxu0 0
        %1323 = vmatprep.subr.bf16.mxu0 0
        %1324 = vmatpush1.bf16.msra.mxu0 0
        %1325 = vmatprep.subr.bf16.mxu0 0
        %1326 = vmatpush1.bf16.msra.mxu0 0
        %1327 = vmatprep.subr.bf16.mxu0 0
        %1328 = vmatpush1.bf16.msra.mxu0 0
        %1329 = vmatprep.subr.bf16.mxu0 0
        %1330 = vmatpush1.bf16.msra.mxu0 0
        %1331 = vmatprep.subr.bf16.mxu0 0
        %1332 = vmatpush1.bf16.msra.mxu0 0
        %1333 = vmatprep.subr.bf16.mxu0 0
        %1334 = vmatpush1.bf16.msra.mxu0 %v1315
        %1335 = vmatprep.subr.bf16.mxu0 0
        %1336 = vmatpush1.bf16.msra.mxu0 %v1314
        %1337 = vmatprep.subr.bf16.mxu0 0
        %1338 = vmatpush2.bf16.msra.mxu0 0
        %1339 = vmatprep.subr.bf16.mxu0 0
        %1340 = vmatpush2.bf16.msra.mxu0 0
        %1341 = vmatprep.subr.bf16.mxu0 0
        %1342 = vmatpush2.bf16.msra.mxu0 0
        %1343 = vmatprep.subr.bf16.mxu0 0
        %1344 = vmatpush2.bf16.msra.mxu0 0
        %1345 = vmatprep.subr.bf16.mxu0 0
        %1346 = vmatpush2.bf16.msra.mxu0 0
        %1347 = vmatprep.subr.bf16.mxu0 0
        %1348 = vmatpush2.bf16.msra.mxu0 0
        %1349 = vmatprep.subr.bf16.mxu0 0
        %1350 = vmatpush2.bf16.msra.mxu0 0
        %1351 = vmatprep.subr.bf16.mxu0 0
        %1352 = vmatpush2.bf16.msra.mxu0 0
        %1353 = vmatprep.mubr.bf16.mxu0 0
        %1354 = vmatmul.mubr.bf16.gmra.mxu0 %v1319
        %v1355 = vpop.f32.mrf.mxu0
        %v1356 = vadd.f32 %v1304, %v1355
        %v1357 = vpop.f32.mrf.mxu0
        %v1358 = vpop.f32.mrf.mxu0
        %v1359 = vpop.f32.mrf.mxu0
        %1360 = vdwg.mxu0
        %v1361 = vadd.f32 %v729, %v1356
        %v1362 = vld [vmem:[%s717] sm:$0x1]
        %v1363 = vld [vmem:[%s720] sm:$0x1]
        %v1364 = vsel %vm739, %v1361, 0.0
        %1365 = vadd.xlane.f32.xlu0 %v1364
        %v1366 = vpop.xlane.xlu0 %1365
        %v1367 = vmul.f32 %v1366, %v743
        %v1368 = vsub.f32 %v1361, %v1367
        %v1369 = vmul.f32 %v1368, %v1368
        %v1370 = vsel %vm739, %v1369, 0.0
        %1371 = vadd.xlane.f32.xlu0 %v1370
        %v1372 = vpop.xlane.xlu0 %1371
        %v1373 = vmul.f32 %v1372, %v743
        %v1374 = vadd.f32 %v1373, 1e-05
        %v1375 = vrsqrt.pop %v1374
        %v1376 = vmul.f32 %v1368, %v1375
        %v1378 = vlaneseq
        %v1379 = vshrl.u32 %v1378, 7
        %v1380 = vsub.s32 0, %v1379
        %v1381 = vrot.slane %v1362, %v1380
        %v1383 = vmul.f32 %v1376, %v1381
        %v1385 = vlaneseq
        %v1386 = vshrl.u32 %v1385, 7
        %v1387 = vsub.s32 0, %v1386
        %v1388 = vrot.slane %v1363, %v1387
        %v1390 = vadd.f32 %v1383, %v1388
        %v1391 = vpack.c.bf16 %v1390, %v1390
        %v1392 = vld [vmem:[%s697] sm:$0xf]
        %v1393 = vld [vmem:[%s697 + $0x4] sm:$0xf]
        %v1394 = vld [vmem:[%s697 + $0x8] sm:$0xf]
        %v1395 = vld [vmem:[%s697 + $0xc] sm:$0xf]
        %v1396 = vld [vmem:[%s700] sm:$0x1]
        %v1398 = vlaneseq
        %v1399 = vshrl.u32 %v1398, 7
        %v1400 = vsub.s32 0, %v1399
        %v1401 = vrot.slane %v1396, %v1400
        %v1407 = vunpack.c.l.b16 %v1392
        %v1408 = vunpack.c.l.b16 %v1393
        %v1409 = vunpack.c.l.b16 %v1394
        %v1410 = vunpack.c.l.b16 %v1395
        %v1411 = vpack.c.b16 %v1408, %v1407
        %v1412 = vpack.c.b16 %v1410, %v1409
        %v1416 = vsel %vm739, %v1391, 0
        %1418 = vmatprep.subr.bf16.mxu0 0
        %1419 = vmatpush1.bf16.msra.mxu0 0
        %1420 = vmatprep.subr.bf16.mxu0 0
        %1421 = vmatpush1.bf16.msra.mxu0 0
        %1422 = vmatprep.subr.bf16.mxu0 0
        %1423 = vmatpush1.bf16.msra.mxu0 0
        %1424 = vmatprep.subr.bf16.mxu0 0
        %1425 = vmatpush1.bf16.msra.mxu0 0
        %1426 = vmatprep.subr.bf16.mxu0 0
        %1427 = vmatpush1.bf16.msra.mxu0 0
        %1428 = vmatprep.subr.bf16.mxu0 0
        %1429 = vmatpush1.bf16.msra.mxu0 0
        %1430 = vmatprep.subr.bf16.mxu0 0
        %1431 = vmatpush1.bf16.msra.mxu0 %v1412
        %1432 = vmatprep.subr.bf16.mxu0 0
        %1433 = vmatpush1.bf16.msra.mxu0 %v1411
        %1434 = vmatprep.subr.bf16.mxu0 0
        %1435 = vmatpush2.bf16.msra.mxu0 0
        %1436 = vmatprep.subr.bf16.mxu0 0
        %1437 = vmatpush2.bf16.msra.mxu0 0
        %1438 = vmatprep.subr.bf16.mxu0 0
        %1439 = vmatpush2.bf16.msra.mxu0 0
        %1440 = vmatprep.subr.bf16.mxu0 0
        %1441 = vmatpush2.bf16.msra.mxu0 0
        %1442 = vmatprep.subr.bf16.mxu0 0
        %1443 = vmatpush2.bf16.msra.mxu0 0
        %1444 = vmatprep.subr.bf16.mxu0 0
        %1445 = vmatpush2.bf16.msra.mxu0 0
        %1446 = vmatprep.subr.bf16.mxu0 0
        %1447 = vmatpush2.bf16.msra.mxu0 0
        %1448 = vmatprep.subr.bf16.mxu0 0
        %1449 = vmatpush2.bf16.msra.mxu0 0
        %1450 = vmatprep.mubr.bf16.mxu0 0
        %1451 = vmatmul.mubr.bf16.gmra.mxu0 %v1416
        %v1452 = vpop.f32.mrf.mxu0
        %v1453 = vadd.f32 %v1401, %v1452
        %v1454 = vpop.f32.mrf.mxu0
        %v1455 = vpop.f32.mrf.mxu0
        %v1456 = vpop.f32.mrf.mxu0
        %1457 = vdwg.mxu0
        %v1458 = vmul.f32 %v1453, 0.5
        %v1459 = vmul.f32 %v1453, 0.70710677
        %v1460 = verf.f32.pop %v1459
        %v1461 = vadd.f32 %v1460, 1.0
        %v1462 = vmul.f32 %v1458, %v1461
        %v1463 = vpack.c.bf16 %v1462, %v1462
        %v1464 = vld [vmem:[%s705] sm:$0xf]
        %v1465 = vld [vmem:[%s705 + $0x4] sm:$0xf]
        %v1466 = vld [vmem:[%s705 + $0x8] sm:$0xf]
        %v1467 = vld [vmem:[%s705 + $0xc] sm:$0xf]
        %v1468 = vld [vmem:[%s705 + $0x10] sm:$0xf]
        %v1469 = vld [vmem:[%s705 + $0x14] sm:$0xf]
        %v1470 = vld [vmem:[%s705 + $0x18] sm:$0xf]
        %v1471 = vld [vmem:[%s705 + $0x1c] sm:$0xf]
        %v1472 = vld [vmem:[%s708] sm:$0x1]
        %v1474 = vlaneseq
        %v1475 = vshrl.u32 %v1474, 7
        %v1476 = vsub.s32 0, %v1475
        %v1477 = vrot.slane %v1472, %v1476
        %v1487 = vunpack.c.l.b16 %v1464
        %v1488 = vunpack.c.l.b16 %v1465
        %v1489 = vunpack.c.l.b16 %v1466
        %v1490 = vunpack.c.l.b16 %v1467
        %v1491 = vunpack.c.l.b16 %v1468
        %v1492 = vunpack.c.l.b16 %v1469
        %v1493 = vunpack.c.l.b16 %v1470
        %v1494 = vunpack.c.l.b16 %v1471
        %v1495 = vpack.c.b16 %v1488, %v1487
        %v1496 = vpack.c.b16 %v1490, %v1489
        %v1497 = vpack.c.b16 %v1492, %v1491
        %v1498 = vpack.c.b16 %v1494, %v1493
        %vm1503 = vcmask 523264
        %v1505 = vsel %vm1503, %v1463, 0
        %1507 = vmatprep.subr.bf16.mxu0 0
        %1508 = vmatpush1.bf16.msra.mxu0 0
        %1509 = vmatprep.subr.bf16.mxu0 0
        %1510 = vmatpush1.bf16.msra.mxu0 0
        %1511 = vmatprep.subr.bf16.mxu0 0
        %1512 = vmatpush1.bf16.msra.mxu0 0
        %1513 = vmatprep.subr.bf16.mxu0 0
        %1514 = vmatpush1.bf16.msra.mxu0 0
        %1515 = vmatprep.subr.bf16.mxu0 0
        %1516 = vmatpush1.bf16.msra.mxu0 %v1498
        %1517 = vmatprep.subr.bf16.mxu0 0
        %1518 = vmatpush1.bf16.msra.mxu0 %v1497
        %1519 = vmatprep.subr.bf16.mxu0 0
        %1520 = vmatpush1.bf16.msra.mxu0 %v1496
        %1521 = vmatprep.subr.bf16.mxu0 0
        %1522 = vmatpush1.bf16.msra.mxu0 %v1495
        %1523 = vmatprep.subr.bf16.mxu0 0
        %1524 = vmatpush2.bf16.msra.mxu0 0
        %1525 = vmatprep.subr.bf16.mxu0 0
        %1526 = vmatpush2.bf16.msra.mxu0 0
        %1527 = vmatprep.subr.bf16.mxu0 0
        %1528 = vmatpush2.bf16.msra.mxu0 0
        %1529 = vmatprep.subr.bf16.mxu0 0
        %1530 = vmatpush2.bf16.msra.mxu0 0
        %1531 = vmatprep.subr.bf16.mxu0 0
        %1532 = vmatpush2.bf16.msra.mxu0 0
        %1533 = vmatprep.subr.bf16.mxu0 0
        %1534 = vmatpush2.bf16.msra.mxu0 0
        %1535 = vmatprep.subr.bf16.mxu0 0
        %1536 = vmatpush2.bf16.msra.mxu0 0
        %1537 = vmatprep.subr.bf16.mxu0 0
        %1538 = vmatpush2.bf16.msra.mxu0 0
        %1539 = vmatprep.mubr.bf16.mxu0 0
        %1540 = vmatmul.mubr.bf16.gmra.mxu0 %v1505
        %v1541 = vpop.f32.mrf.mxu0
        %v1542 = vadd.f32 %v1477, %v1541
        %v1543 = vpop.f32.mrf.mxu0
        %v1544 = vpop.f32.mrf.mxu0
        %v1545 = vpop.f32.mrf.mxu0
        %1546 = vdwg.mxu0
        %v1547 = vadd.f32 %v1361, %v1542
        %1548 = vst.msk [vmem:[#allocation2] sm:$0xff] %vm739, %v1547
        %p1549 = scmp.eq.s32.totalorder %s39, 1
        // Predicated region
        $region89: #{tpu_custom_call.1} parent=75 // pred_check
          %p1550 = pneg %p1549
        $region90: #{tpu_custom_call.1} parent=75 // pred_check_branch
          %1552 = sbr.rel (%p1550) target = $region92
        $region91: #{tpu_custom_call.1} parent=75 // pred_region
          %1553 = vst.msk [vmem:[%s676] sm:$0xff] %vm739, %v1547
        $region92: #{tpu_custom_call.1} parent=75 // pred_fallthru
          _
        %s1554 = sand.u32 %s418, 1
        %s1555 = scalar_lea.sflag [#allocation5], %s1554
        %s1556 = sand.u32 %s418, 1
        %s1557 = smul.addr %s1556, 8
        %s1558 = scalar_lea.vmem [#allocation8], %s1557
        // Predicated region
        $region93: #{tpu_custom_call.1} parent=75 // pred_check
          %p1559 = pneg %p428
        $region94: #{tpu_custom_call.1} parent=75 // pred_check_branch
          %1561 = sbr.rel (%p1559) target = $region96
        $region95: #{tpu_custom_call.1} parent=75 // pred_region
          %s1563 = ssub.s32 128, 128
          %1564 = vsyncadd %s1555, %s1563
          %s1565 = smul.addr %s38, 128
          %s1566 = scalar_lea.hbm %s14, %s1565
          %s1568 = sshll.u32 %s1558, 4
          %s1569 = int_to_ptr.vmem [resolvable:$true] %s1568
          %1571 = dma.vmem_to_hbm [thread:$0]  %s1569, 128, %s1566, %s1555
        $region96: #{tpu_custom_call.1} parent=75 // pred_fallthru
          _
      $region76: #{tpu_custom_call.1} parent=5 // pred_fallthru
        _
      %p1572 = scmp.le.s32.totalorder 2, %s29
      // Predicated region
      $region97: #{tpu_custom_call.1} parent=5 // pred_check
        %p1573 = pneg %p1572
      $region98: #{tpu_custom_call.1} parent=5 // pred_check_branch
        %1575 = sbr.rel (%p1573) target = $region100
      $region99: #{tpu_custom_call.1} parent=5 // pred_region
        %s1576 = ssub.s32 %s29, 2
        // Predicated region
        $region101: #{tpu_custom_call.1} parent=99 // pred_check
          %p1577 = pneg %p434
        $region102: #{tpu_custom_call.1} parent=99 // pred_check_branch
          %1579 = sbr.rel (%p1577) target = $region104
        $region103: #{tpu_custom_call.1} parent=99 // pred_region
          %s1580 = sand.u32 %s419, 1
          %s1581 = scalar_lea.sflag [#allocation5], %s1580
          %s1582 = sand.u32 %s419, 1
          %s1583 = smul.addr %s1582, 8
          %s1584 = scalar_lea.vmem [#allocation8], %s1583
          %1585 = dma.done %s1581, 128
        $region104: #{tpu_custom_call.1} parent=99 // pred_fallthru
          _
      $region100: #{tpu_custom_call.1} parent=5 // pred_fallthru
        _
    $region6: #{tpu_custom_call.1} parent=1 // loop_footer
      %s33 = sadd.s32 1, %s29
    $region7: #{tpu_custom_call.1} parent=1 // loop_footer_branch
      %28 = sbr.rel target = $region3
    $region8: #{tpu_custom_call.1} parent=1 // loop_exit
      _
    %1586 = vsyncpa [#allocation4], 1
    %s1587 = scalar_lea.sflag [#allocation4], 1
    %1588 = vsyncpa %s1587, 1
    %1589 = vsyncpa [#allocation7], 1
    %s1590 = scalar_lea.sflag [#allocation7], 1
    %1591 = vsyncpa %s1590, 1
    %1592 = vsyncpa [#allocation5], 1
    %s1593 = scalar_lea.sflag [#allocation5], 1
    %1594 = vsyncpa %s1593, 1

</llo_original>
